<compile_context>
chip_gen: v5e
topology: v5e:2x2
jax: 0.10.0
libtpu: 0.0.40
codegen_flags: <defaults>
</compile_context>

<pallas_src>
import functools

import jax
import jax.numpy as jnp
from jax.experimental import pallas as pl
from jax.experimental.pallas import tpu as pltpu

EPS = 1e-5        # BatchNorm eps
FP = 128          # lane padding per layer output / MLP hidden (one vreg lane tile)

# vpack row indices
_ROW_WA, _ROW_BA = 12, 13
_ROW_B1, _ROW_MSC, _ROW_MSH, _ROW_W2, _ROW_B2 = 14, 15, 16, 17, 18


# --------------------------------------------------------------------------
# Fused forward kernel: G graphs per grid step, everything stays in VMEM/vregs.
# --------------------------------------------------------------------------
def fused_kernel(a_ref, x_ref, w_ref, v_ref, out_ref):
    gn, n = a_ref.shape          # (G*N, N) flattened block-diagonal adjacency
    g = gn // n
    f0 = x_ref.shape[-1]         # raw input feature width

    a = a_ref[...]               # (G*N, N)   bf16
    v = v_ref[...]               # (24, 128)  f32 packed vectors

    def seg_concat(fn):
        # static per-graph loop; pieces are sublane-tile aligned (N % 8 == 0)
        return jnp.concatenate([fn(i) for i in range(g)], axis=0)

    def gcn_layer(x_bf, w, vb):
        # x_bf: (G*N, Fin) bf16,  w: (Fin, 2*FP) bf16 = [W | Wr] lane-padded
        xw = jnp.dot(x_bf, w, preferred_element_type=jnp.float32)  # (G*N, 2*FP)
        conv = xw[:, :FP]                                          # GraphConv path
        res = jnp.maximum(xw[:, FP:] + v[vb + 1:vb + 2, :], 0.0)   # residual path
        conv_bf = conv.astype(jnp.bfloat16)
        # block-diagonal A @ (X W): tiny per-graph (N,N)@(N,FP) matmuls
        agg = seg_concat(lambda i: jnp.dot(
            a[i * n:(i + 1) * n, :], conv_bf[i * n:(i + 1) * n, :],
            preferred_element_type=jnp.float32))
        h = jnp.maximum(agg + v[vb:vb + 1, :], 0.0)
        # folded BatchNorm (eval): scale/shift
        return (h + res) * v[vb + 2:vb + 3, :] + v[vb + 3:vb + 4, :]

    x0 = x_ref[...]                                            # (G*N, F0) bf16
    h1 = gcn_layer(x0, w_ref[0:f0, :], 0)                      # meaningful width 32
    h2 = gcn_layer(h1.astype(jnp.bfloat16), w_ref[f0:f0 + FP, :], 4)          # 64
    h3 = gcn_layer(h2.astype(jnp.bfloat16), w_ref[f0 + FP:f0 + 2 * FP, :], 8)  # 128

    # ---- WeightedSumAndMax readout (VPU gate + per-graph XLU reduces)
    wa = v[_ROW_WA:_ROW_WA + 1, :]
    ba = v[_ROW_BA:_ROW_BA + 1, 0:1]
    gate = jax.nn.sigmoid(jnp.sum(h3 * wa, axis=-1, keepdims=True) + ba)  # (G*N,1)
    gh = gate * h3
    wsum = seg_concat(lambda i: jnp.sum(gh[i * n:(i + 1) * n, :],
                                        axis=0, keepdims=True))           # (G, FP)
    wmax = seg_concat(lambda i: jnp.max(h3[i * n:(i + 1) * n, :],
                                        axis=0, keepdims=True))           # (G, FP)

    # ---- MLP head: split [wsum | wmax] @ MW1 to avoid an in-kernel lane concat
    mw_sum = w_ref[f0 + 2 * FP:f0 + 3 * FP, 0:FP]              # (FP, FP) bf16
    mw_max = w_ref[f0 + 3 * FP:f0 + 4 * FP, 0:FP]              # (FP, FP) bf16
    mh = (jnp.dot(wsum.astype(jnp.bfloat16), mw_sum, preferred_element_type=jnp.float32)
          + jnp.dot(wmax.astype(jnp.bfloat16), mw_max, preferred_element_type=jnp.float32))
    mh = jnp.maximum(mh + v[_ROW_B1:_ROW_B1 + 1, :], 0.0)
    mh = mh * v[_ROW_MSC:_ROW_MSC + 1, :] + v[_ROW_MSH:_ROW_MSH + 1, :]
    # n_tasks == 1 head as a lane reduce (no width-1 MXU op)
    out_col = (jnp.sum(mh * v[_ROW_W2:_ROW_W2 + 1, :], axis=-1, keepdims=True)
               + v[_ROW_B2:_ROW_B2 + 1, 0:1])                              # (G, 1)
    # lane-dense, unmasked (G,128) store; wrapper keeps column 0
    out_ref[...] = jnp.broadcast_to(out_col, (g, FP))


# --------------------------------------------------------------------------
# Host-side parameter folding/packing (wrapper-side precompute)
# --------------------------------------------------------------------------
def _fold_bn(gamma, beta, mean, var):
    scale = gamma * jax.lax.rsqrt(var + EPS)
    shift = beta - mean * scale
    return scale, shift


def _pad_lane(vec, fill=0.0):
    vec = jnp.asarray(vec, jnp.float32).reshape(-1)
    row = jnp.full((FP,), fill, jnp.float32)
    return row.at[:vec.shape[0]].set(vec)


def _pack_wstack(params, f0):
    """[W1|Wr1] ; [W2|Wr2] ; [W3|Wr3] ; MW1  ->  (f0 + 4*FP, 2*FP) bf16."""
    def blockw(w, wr, fin_rows):
        fin, fout = w.shape
        blk = jnp.zeros((fin_rows, 2 * FP), jnp.float32)
        blk = blk.at[:fin, :fout].set(w)
        blk = blk.at[:fin, FP:FP + fout].set(wr)
        return blk

    b1 = blockw(params["gnn"]["w"], params["gnn"]["wr"], f0)
    b2 = blockw(params["gnn1"]["w"], params["gnn1"]["wr"], FP)
    b3 = blockw(params["gnn2"]["w"], params["gnn2"]["wr"], FP)

    w1 = params["mlp"]["w1"]                      # (2*gnn_out, H)
    gnn_out = params["gnn2"]["w"].shape[1]
    h = w1.shape[1]
    mblk = jnp.zeros((2 * FP, 2 * FP), jnp.float32)
    mblk = mblk.at[:gnn_out, :h].set(w1[:gnn_out])          # weighted-sum half
    mblk = mblk.at[FP:FP + gnn_out, :h].set(w1[gnn_out:])   # max half
    return jnp.concatenate([b1, b2, b3, mblk], axis=0).astype(jnp.bfloat16)


def _pack_vpack(params):
    rows = []
    for name in ("gnn", "gnn1", "gnn2"):
        p = params[name]
        scale, shift = _fold_bn(p["gamma"], p["beta"], p["mean"], p["var"])
        rows += [_pad_lane(p["b"]), _pad_lane(p["br"]),
                 _pad_lane(scale, fill=1.0), _pad_lane(shift)]
    rows.append(_pad_lane(params["readout"]["wa"][:, 0]))   # row 12
    rows.append(_pad_lane(params["readout"]["ba"]))         # row 13 (scalar @ lane 0)
    p = params["mlp"]
    scale, shift = _fold_bn(p["gamma"], p["beta"], p["mean"], p["var"])
    rows += [_pad_lane(p["b1"]), _pad_lane(scale, fill=1.0), _pad_lane(shift),
             _pad_lane(p["w2"][:, 0]), _pad_lane(p["b2"])]   # rows 14..18
    v = jnp.stack(rows, axis=0)                              # (19, 128)
    pad = (-v.shape[0]) % 8
    if pad:
        v = jnp.concatenate([v, jnp.zeros((pad, FP), jnp.float32)], axis=0)
    return v                                                 # (24, 128)


# --------------------------------------------------------------------------
# Forward pass: single pallas_call, G graphs per grid step.
# --------------------------------------------------------------------------
@functools.partial(jax.jit, static_argnames=("graphs_per_step",))
def gcn_predictor_forward(adj, feats, params, graphs_per_step=8):
    B, N, _ = adj.shape
    f0 = feats.shape[-1]
    g = graphs_per_step
    assert B % g == 0, "batch must be divisible by graphs_per_step"
    assert g % 8 == 0 and N % 8 == 0 and f0 % 8 == 0
    assert params["gnn2"]["w"].shape[1] <= FP and params["mlp"]["w1"].shape[1] <= FP
    num_steps = B // g

    wstack = _pack_wstack(params, f0)            # (f0 + 512, 256) bf16
    vpack = _pack_vpack(params)                  # (24, 128)       f32
    a2d = adj.reshape(B * N, N).astype(jnp.bfloat16)
    x2d = feats.reshape(B * N, f0).astype(jnp.bfloat16)

    out2d = pl.pallas_call(
        fused_kernel,
        out_shape=jax.ShapeDtypeStruct((B, FP), jnp.float32),
        grid=(num_steps,),
        in_specs=[
            pl.BlockSpec((g * N, N), lambda b: (b, 0)),
            pl.BlockSpec((g * N, f0), lambda b: (b, 0)),
            pl.BlockSpec(wstack.shape, lambda b: (0, 0)),
            pl.BlockSpec(vpack.shape, lambda b: (0, 0)),
        ],
        out_specs=pl.BlockSpec((g, FP), lambda b: (b, 0)),
        compiler_params=pltpu.CompilerParams(
            dimension_semantics=("parallel",)),
    )(a2d, x2d, wstack, vpack)
    return out2d[:, :1]                          # (B, n_tasks=1)


# --------------------------------------------------------------------------
# Parameter construction (deterministic, synthetic, eval-mode BN stats)
# --------------------------------------------------------------------------
def _gcn_params(key, fin, fout):
    k1, k2 = jax.random.split(key)
    return {
        "w": 0.1 * jax.random.normal(k1, (fin, fout), jnp.float32),
        "b": jnp.zeros((1, fout), jnp.float32),
        "wr": 0.1 * jax.random.normal(k2, (fin, fout), jnp.float32),
        "br": jnp.zeros((1, fout), jnp.float32),
        "gamma": jnp.ones((1, fout), jnp.float32),
        "beta": jnp.zeros((1, fout), jnp.float32),
        "mean": jnp.zeros((1, fout), jnp.float32),
        "var": jnp.ones((1, fout), jnp.float32),
    }


def make_params(key, in_feats, hidden, n_tasks=1, predictor_hidden=128):
    ks = jax.random.split(key, 6)
    h = hidden
    p = {
        "gnn":  _gcn_params(ks[0], in_feats, h),     # in_feats -> h
        "gnn1": _gcn_params(ks[1], h, 2 * h),        # h        -> 2h
        "gnn2": _gcn_params(ks[2], 2 * h, 4 * h),    # 2h       -> 4h
    }
    gnn_out = 4 * h
    p["readout"] = {
        "wa": 0.1 * jax.random.normal(ks[3], (gnn_out, 1), jnp.float32),
        "ba": jnp.zeros((1, 1), jnp.float32),
    }
    p["mlp"] = {
        "w1": 0.1 * jax.random.normal(ks[4], (2 * gnn_out, predictor_hidden),
                                      jnp.float32),
        "b1": jnp.zeros((1, predictor_hidden), jnp.float32),
        "gamma": jnp.ones((1, predictor_hidden), jnp.float32),
        "beta": jnp.zeros((1, predictor_hidden), jnp.float32),
        "mean": jnp.zeros((1, predictor_hidden), jnp.float32),
        "var": jnp.ones((1, predictor_hidden), jnp.float32),
        "w2": 0.1 * jax.random.normal(ks[5], (predictor_hidden, n_tasks),
                                      jnp.float32),
        "b2": jnp.zeros((1, n_tasks), jnp.float32),
    }
    return p


if __name__ == "__main__":
    B, N = 16, 16         # 16 graphs, 16 nodes each  (8 graphs per grid step)
    in_feats = 32
    hidden = 32           # hidden_feats=[32] => gnn_out_feats = 128

    key = jax.random.PRNGKey(0)
    k_feat, k_adj, k_par = jax.random.split(key, 3)

    feats = jax.random.normal(k_feat, (B, N, in_feats), jnp.float32)
    # symmetric random adjacency with self-loops (GraphConv norm='none' -> A @ X)
    a = jax.random.bernoulli(k_adj, 0.3, (B, N, N)).astype(jnp.float32)
    adj = jnp.maximum(a, jnp.transpose(a, (0, 2, 1)))
    adj = jnp.maximum(adj, jnp.eye(N, dtype=jnp.float32)[None])

    params = make_params(k_par, in_feats, hidden, n_tasks=1,
                         predictor_hidden=128)

    out = gcn_predictor_forward(adj, feats, params, graphs_per_step=8)
    jax.block_until_ready(out)
    assert out.shape == (B, 1) and out.dtype == jnp.float32
    print("KERNEL_OK")
</pallas_src>

<mosaic_0001>
module attributes {stable_mosaic.version = 11 : i64} {
  func.func @fused_kernel(%arg0: i32, %arg1: memref<128x16xbf16, #tpu.memory_space<vmem>>, %arg2: memref<128x32xbf16, #tpu.memory_space<vmem>>, %arg3: memref<544x256xbf16, #tpu.memory_space<vmem>>, %arg4: memref<24x128xf32, #tpu.memory_space<vmem>>, %arg5: memref<8x128xf32, #tpu.memory_space<vmem>>) attributes {dimension_semantics = [#tpu.dimension_semantics<parallel>], iteration_bounds = array<i64: 2>, scalar_prefetch = 0 : i64, scratch_operands = 0 : i64, tpu.core_type = #tpu.core_type<tc>, window_params = [{transform_indices = @transform_0, window_bounds = array<i64: 128, 16>}, {transform_indices = @transform_1, window_bounds = array<i64: 128, 32>}, {pipeline_mode = #tpu.pipeline_mode<synchronous>, transform_indices = @transform_2, window_bounds = array<i64: 544, 256>}, {pipeline_mode = #tpu.pipeline_mode<synchronous>, transform_indices = @transform_3, window_bounds = array<i64: 24, 128>}, {transform_indices = @transform_4, window_bounds = array<i64: 8, 128>}]} {
    %c0 = arith.constant 0 : index
    %c0_0 = arith.constant 0 : index
    %0 = vector.load %arg1[%c0, %c0_0] : memref<128x16xbf16, #tpu.memory_space<vmem>>, vector<128x16xbf16>
    %c0_1 = arith.constant 0 : index
    %c0_2 = arith.constant 0 : index
    %1 = vector.load %arg4[%c0_1, %c0_2] : memref<24x128xf32, #tpu.memory_space<vmem>>, vector<24x128xf32>
    %c0_3 = arith.constant 0 : index
    %c0_4 = arith.constant 0 : index
    %2 = vector.load %arg2[%c0_3, %c0_4] : memref<128x32xbf16, #tpu.memory_space<vmem>>, vector<128x32xbf16>
    %c0_5 = arith.constant 0 : index
    %c0_6 = arith.constant 0 : index
    %3 = vector.load %arg3[%c0_5, %c0_6] : memref<544x256xbf16, #tpu.memory_space<vmem>>, vector<32x256xbf16>
    %cst = arith.constant dense<0.000000e+00> : vector<128x256xf32>
    %4 = tpu.matmul %2, %3, %cst {dimension_numbers = #tpu.dot_dimension_numbers<[1], [0], [0], [1], [0, 0, 1, 1], [], []>} : vector<128x32xbf16>, vector<32x256xbf16>, vector<128x256xf32> -> vector<128x256xf32>
    %5 = vector.extract_strided_slice %4 {offsets = [0, 0], sizes = [128, 128], strides = [1, 1]} : vector<128x256xf32> to vector<128x128xf32>
    %6 = vector.extract_strided_slice %4 {offsets = [0, 128], sizes = [128, 128], strides = [1, 1]} : vector<128x256xf32> to vector<128x128xf32>
    %7 = vector.extract_strided_slice %1 {offsets = [1, 0], sizes = [1, 128], strides = [1, 1]} : vector<24x128xf32> to vector<1x128xf32>
    %8 = vector.broadcast %7 : vector<1x128xf32> to vector<128x128xf32>
    %9 = arith.addf %6, %8 : vector<128x128xf32>
    %cst_7 = arith.constant 0.000000e+00 : f32
    %10 = vector.broadcast %cst_7 : f32 to vector<128x128xf32>
    %11 = arith.maximumf %9, %10 : vector<128x128xf32>
    %12 = arith.truncf %5 : vector<128x128xf32> to vector<128x128xbf16>
    %13 = vector.extract_strided_slice %0 {offsets = [0, 0], sizes = [16, 16], strides = [1, 1]} : vector<128x16xbf16> to vector<16x16xbf16>
    %14 = vector.extract_strided_slice %12 {offsets = [0, 0], sizes = [16, 128], strides = [1, 1]} : vector<128x128xbf16> to vector<16x128xbf16>
    %cst_8 = arith.constant dense<0.000000e+00> : vector<16x128xf32>
    %15 = tpu.matmul %13, %14, %cst_8 {dimension_numbers = #tpu.dot_dimension_numbers<[1], [0], [0], [1], [0, 0, 1, 1], [], []>} : vector<16x16xbf16>, vector<16x128xbf16>, vector<16x128xf32> -> vector<16x128xf32>
    %16 = vector.extract_strided_slice %0 {offsets = [16, 0], sizes = [16, 16], strides = [1, 1]} : vector<128x16xbf16> to vector<16x16xbf16>
    %17 = vector.extract_strided_slice %12 {offsets = [16, 0], sizes = [16, 128], strides = [1, 1]} : vector<128x128xbf16> to vector<16x128xbf16>
    %cst_9 = arith.constant dense<0.000000e+00> : vector<16x128xf32>
    %18 = tpu.matmul %16, %17, %cst_9 {dimension_numbers = #tpu.dot_dimension_numbers<[1], [0], [0], [1], [0, 0, 1, 1], [], []>} : vector<16x16xbf16>, vector<16x128xbf16>, vector<16x128xf32> -> vector<16x128xf32>
    %19 = vector.extract_strided_slice %0 {offsets = [32, 0], sizes = [16, 16], strides = [1, 1]} : vector<128x16xbf16> to vector<16x16xbf16>
    %20 = vector.extract_strided_slice %12 {offsets = [32, 0], sizes = [16, 128], strides = [1, 1]} : vector<128x128xbf16> to vector<16x128xbf16>
    %cst_10 = arith.constant dense<0.000000e+00> : vector<16x128xf32>
    %21 = tpu.matmul %19, %20, %cst_10 {dimension_numbers = #tpu.dot_dimension_numbers<[1], [0], [0], [1], [0, 0, 1, 1], [], []>} : vector<16x16xbf16>, vector<16x128xbf16>, vector<16x128xf32> -> vector<16x128xf32>
    %22 = vector.extract_strided_slice %0 {offsets = [48, 0], sizes = [16, 16], strides = [1, 1]} : vector<128x16xbf16> to vector<16x16xbf16>
    %23 = vector.extract_strided_slice %12 {offsets = [48, 0], sizes = [16, 128], strides = [1, 1]} : vector<128x128xbf16> to vector<16x128xbf16>
    %cst_11 = arith.constant dense<0.000000e+00> : vector<16x128xf32>
    %24 = tpu.matmul %22, %23, %cst_11 {dimension_numbers = #tpu.dot_dimension_numbers<[1], [0], [0], [1], [0, 0, 1, 1], [], []>} : vector<16x16xbf16>, vector<16x128xbf16>, vector<16x128xf32> -> vector<16x128xf32>
    %25 = vector.extract_strided_slice %0 {offsets = [64, 0], sizes = [16, 16], strides = [1, 1]} : vector<128x16xbf16> to vector<16x16xbf16>
    %26 = vector.extract_strided_slice %12 {offsets = [64, 0], sizes = [16, 128], strides = [1, 1]} : vector<128x128xbf16> to vector<16x128xbf16>
    %cst_12 = arith.constant dense<0.000000e+00> : vector<16x128xf32>
    %27 = tpu.matmul %25, %26, %cst_12 {dimension_numbers = #tpu.dot_dimension_numbers<[1], [0], [0], [1], [0, 0, 1, 1], [], []>} : vector<16x16xbf16>, vector<16x128xbf16>, vector<16x128xf32> -> vector<16x128xf32>
    %28 = vector.extract_strided_slice %0 {offsets = [80, 0], sizes = [16, 16], strides = [1, 1]} : vector<128x16xbf16> to vector<16x16xbf16>
    %29 = vector.extract_strided_slice %12 {offsets = [80, 0], sizes = [16, 128], strides = [1, 1]} : vector<128x128xbf16> to vector<16x128xbf16>
    %cst_13 = arith.constant dense<0.000000e+00> : vector<16x128xf32>
    %30 = tpu.matmul %28, %29, %cst_13 {dimension_numbers = #tpu.dot_dimension_numbers<[1], [0], [0], [1], [0, 0, 1, 1], [], []>} : vector<16x16xbf16>, vector<16x128xbf16>, vector<16x128xf32> -> vector<16x128xf32>
    %31 = vector.extract_strided_slice %0 {offsets = [96, 0], sizes = [16, 16], strides = [1, 1]} : vector<128x16xbf16> to vector<16x16xbf16>
    %32 = vector.extract_strided_slice %12 {offsets = [96, 0], sizes = [16, 128], strides = [1, 1]} : vector<128x128xbf16> to vector<16x128xbf16>
    %cst_14 = arith.constant dense<0.000000e+00> : vector<16x128xf32>
    %33 = tpu.matmul %31, %32, %cst_14 {dimension_numbers = #tpu.dot_dimension_numbers<[1], [0], [0], [1], [0, 0, 1, 1], [], []>} : vector<16x16xbf16>, vector<16x128xbf16>, vector<16x128xf32> -> vector<16x128xf32>
    %34 = vector.extract_strided_slice %0 {offsets = [112, 0], sizes = [16, 16], strides = [1, 1]} : vector<128x16xbf16> to vector<16x16xbf16>
    %35 = vector.extract_strided_slice %12 {offsets = [112, 0], sizes = [16, 128], strides = [1, 1]} : vector<128x128xbf16> to vector<16x128xbf16>
    %cst_15 = arith.constant dense<0.000000e+00> : vector<16x128xf32>
    %36 = tpu.matmul %34, %35, %cst_15 {dimension_numbers = #tpu.dot_dimension_numbers<[1], [0], [0], [1], [0, 0, 1, 1], [], []>} : vector<16x16xbf16>, vector<16x128xbf16>, vector<16x128xf32> -> vector<16x128xf32>
    %37 = tpu.concatenate %15, %18, %21, %24, %27, %30, %33, %36 in 0 : vector<16x128xf32>, vector<16x128xf32>, vector<16x128xf32>, vector<16x128xf32>, vector<16x128xf32>, vector<16x128xf32>, vector<16x128xf32>, vector<16x128xf32> -> vector<128x128xf32>
    %38 = vector.extract_strided_slice %1 {offsets = [0, 0], sizes = [1, 128], strides = [1, 1]} : vector<24x128xf32> to vector<1x128xf32>
    %39 = vector.broadcast %38 : vector<1x128xf32> to vector<128x128xf32>
    %40 = arith.addf %37, %39 : vector<128x128xf32>
    %cst_16 = arith.constant 0.000000e+00 : f32
    %41 = vector.broadcast %cst_16 : f32 to vector<128x128xf32>
    %42 = arith.maximumf %40, %41 : vector<128x128xf32>
    %43 = arith.addf %42, %11 : vector<128x128xf32>
    %44 = vector.extract_strided_slice %1 {offsets = [2, 0], sizes = [1, 128], strides = [1, 1]} : vector<24x128xf32> to vector<1x128xf32>
    %45 = vector.broadcast %44 : vector<1x128xf32> to vector<128x128xf32>
    %46 = arith.mulf %43, %45 : vector<128x128xf32>
    %47 = vector.extract_strided_slice %1 {offsets = [3, 0], sizes = [1, 128], strides = [1, 1]} : vector<24x128xf32> to vector<1x128xf32>
    %48 = vector.broadcast %47 : vector<1x128xf32> to vector<128x128xf32>
    %49 = arith.addf %46, %48 : vector<128x128xf32>
    %50 = arith.truncf %49 : vector<128x128xf32> to vector<128x128xbf16>
    %c32 = arith.constant 32 : index
    %c0_17 = arith.constant 0 : index
    %51 = vector.load %arg3[%c32, %c0_17] : memref<544x256xbf16, #tpu.memory_space<vmem>>, vector<128x256xbf16>
    %cst_18 = arith.constant dense<0.000000e+00> : vector<128x256xf32>
    %52 = tpu.matmul %50, %51, %cst_18 {dimension_numbers = #tpu.dot_dimension_numbers<[1], [0], [0], [1], [0, 0, 1, 1], [], []>} : vector<128x128xbf16>, vector<128x256xbf16>, vector<128x256xf32> -> vector<128x256xf32>
    %53 = vector.extract_strided_slice %52 {offsets = [0, 0], sizes = [128, 128], strides = [1, 1]} : vector<128x256xf32> to vector<128x128xf32>
    %54 = vector.extract_strided_slice %52 {offsets = [0, 128], sizes = [128, 128], strides = [1, 1]} : vector<128x256xf32> to vector<128x128xf32>
    %55 = vector.extract_strided_slice %1 {offsets = [5, 0], sizes = [1, 128], strides = [1, 1]} : vector<24x128xf32> to vector<1x128xf32>
    %56 = vector.broadcast %55 : vector<1x128xf32> to vector<128x128xf32>
    %57 = arith.addf %54, %56 : vector<128x128xf32>
    %cst_19 = arith.constant 0.000000e+00 : f32
    %58 = vector.broadcast %cst_19 : f32 to vector<128x128xf32>
    %59 = arith.maximumf %57, %58 : vector<128x128xf32>
    %60 = arith.truncf %53 : vector<128x128xf32> to vector<128x128xbf16>
    %61 = vector.extract_strided_slice %0 {offsets = [0, 0], sizes = [16, 16], strides = [1, 1]} : vector<128x16xbf16> to vector<16x16xbf16>
    %62 = vector.extract_strided_slice %60 {offsets = [0, 0], sizes = [16, 128], strides = [1, 1]} : vector<128x128xbf16> to vector<16x128xbf16>
    %cst_20 = arith.constant dense<0.000000e+00> : vector<16x128xf32>
    %63 = tpu.matmul %61, %62, %cst_20 {dimension_numbers = #tpu.dot_dimension_numbers<[1], [0], [0], [1], [0, 0, 1, 1], [], []>} : vector<16x16xbf16>, vector<16x128xbf16>, vector<16x128xf32> -> vector<16x128xf32>
    %64 = vector.extract_strided_slice %0 {offsets = [16, 0], sizes = [16, 16], strides = [1, 1]} : vector<128x16xbf16> to vector<16x16xbf16>
    %65 = vector.extract_strided_slice %60 {offsets = [16, 0], sizes = [16, 128], strides = [1, 1]} : vector<128x128xbf16> to vector<16x128xbf16>
    %cst_21 = arith.constant dense<0.000000e+00> : vector<16x128xf32>
    %66 = tpu.matmul %64, %65, %cst_21 {dimension_numbers = #tpu.dot_dimension_numbers<[1], [0], [0], [1], [0, 0, 1, 1], [], []>} : vector<16x16xbf16>, vector<16x128xbf16>, vector<16x128xf32> -> vector<16x128xf32>
    %67 = vector.extract_strided_slice %0 {offsets = [32, 0], sizes = [16, 16], strides = [1, 1]} : vector<128x16xbf16> to vector<16x16xbf16>
    %68 = vector.extract_strided_slice %60 {offsets = [32, 0], sizes = [16, 128], strides = [1, 1]} : vector<128x128xbf16> to vector<16x128xbf16>
    %cst_22 = arith.constant dense<0.000000e+00> : vector<16x128xf32>
    %69 = tpu.matmul %67, %68, %cst_22 {dimension_numbers = #tpu.dot_dimension_numbers<[1], [0], [0], [1], [0, 0, 1, 1], [], []>} : vector<16x16xbf16>, vector<16x128xbf16>, vector<16x128xf32> -> vector<16x128xf32>
    %70 = vector.extract_strided_slice %0 {offsets = [48, 0], sizes = [16, 16], strides = [1, 1]} : vector<128x16xbf16> to vector<16x16xbf16>
    %71 = vector.extract_strided_slice %60 {offsets = [48, 0], sizes = [16, 128], strides = [1, 1]} : vector<128x128xbf16> to vector<16x128xbf16>
    %cst_23 = arith.constant dense<0.000000e+00> : vector<16x128xf32>
    %72 = tpu.matmul %70, %71, %cst_23 {dimension_numbers = #tpu.dot_dimension_numbers<[1], [0], [0], [1], [0, 0, 1, 1], [], []>} : vector<16x16xbf16>, vector<16x128xbf16>, vector<16x128xf32> -> vector<16x128xf32>
    %73 = vector.extract_strided_slice %0 {offsets = [64, 0], sizes = [16, 16], strides = [1, 1]} : vector<128x16xbf16> to vector<16x16xbf16>
    %74 = vector.extract_strided_slice %60 {offsets = [64, 0], sizes = [16, 128], strides = [1, 1]} : vector<128x128xbf16> to vector<16x128xbf16>
    %cst_24 = arith.constant dense<0.000000e+00> : vector<16x128xf32>
    %75 = tpu.matmul %73, %74, %cst_24 {dimension_numbers = #tpu.dot_dimension_numbers<[1], [0], [0], [1], [0, 0, 1, 1], [], []>} : vector<16x16xbf16>, vector<16x128xbf16>, vector<16x128xf32> -> vector<16x128xf32>
    %76 = vector.extract_strided_slice %0 {offsets = [80, 0], sizes = [16, 16], strides = [1, 1]} : vector<128x16xbf16> to vector<16x16xbf16>
    %77 = vector.extract_strided_slice %60 {offsets = [80, 0], sizes = [16, 128], strides = [1, 1]} : vector<128x128xbf16> to vector<16x128xbf16>
    %cst_25 = arith.constant dense<0.000000e+00> : vector<16x128xf32>
    %78 = tpu.matmul %76, %77, %cst_25 {dimension_numbers = #tpu.dot_dimension_numbers<[1], [0], [0], [1], [0, 0, 1, 1], [], []>} : vector<16x16xbf16>, vector<16x128xbf16>, vector<16x128xf32> -> vector<16x128xf32>
    %79 = vector.extract_strided_slice %0 {offsets = [96, 0], sizes = [16, 16], strides = [1, 1]} : vector<128x16xbf16> to vector<16x16xbf16>
    %80 = vector.extract_strided_slice %60 {offsets = [96, 0], sizes = [16, 128], strides = [1, 1]} : vector<128x128xbf16> to vector<16x128xbf16>
    %cst_26 = arith.constant dense<0.000000e+00> : vector<16x128xf32>
    %81 = tpu.matmul %79, %80, %cst_26 {dimension_numbers = #tpu.dot_dimension_numbers<[1], [0], [0], [1], [0, 0, 1, 1], [], []>} : vector<16x16xbf16>, vector<16x128xbf16>, vector<16x128xf32> -> vector<16x128xf32>
    %82 = vector.extract_strided_slice %0 {offsets = [112, 0], sizes = [16, 16], strides = [1, 1]} : vector<128x16xbf16> to vector<16x16xbf16>
    %83 = vector.extract_strided_slice %60 {offsets = [112, 0], sizes = [16, 128], strides = [1, 1]} : vector<128x128xbf16> to vector<16x128xbf16>
    %cst_27 = arith.constant dense<0.000000e+00> : vector<16x128xf32>
    %84 = tpu.matmul %82, %83, %cst_27 {dimension_numbers = #tpu.dot_dimension_numbers<[1], [0], [0], [1], [0, 0, 1, 1], [], []>} : vector<16x16xbf16>, vector<16x128xbf16>, vector<16x128xf32> -> vector<16x128xf32>
    %85 = tpu.concatenate %63, %66, %69, %72, %75, %78, %81, %84 in 0 : vector<16x128xf32>, vector<16x128xf32>, vector<16x128xf32>, vector<16x128xf32>, vector<16x128xf32>, vector<16x128xf32>, vector<16x128xf32>, vector<16x128xf32> -> vector<128x128xf32>
    %86 = vector.extract_strided_slice %1 {offsets = [4, 0], sizes = [1, 128], strides = [1, 1]} : vector<24x128xf32> to vector<1x128xf32>
    %87 = vector.broadcast %86 : vector<1x128xf32> to vector<128x128xf32>
    %88 = arith.addf %85, %87 : vector<128x128xf32>
    %cst_28 = arith.constant 0.000000e+00 : f32
    %89 = vector.broadcast %cst_28 : f32 to vector<128x128xf32>
    %90 = arith.maximumf %88, %89 : vector<128x128xf32>
    %91 = arith.addf %90, %59 : vector<128x128xf32>
    %92 = vector.extract_strided_slice %1 {offsets = [6, 0], sizes = [1, 128], strides = [1, 1]} : vector<24x128xf32> to vector<1x128xf32>
    %93 = vector.broadcast %92 : vector<1x128xf32> to vector<128x128xf32>
    %94 = arith.mulf %91, %93 : vector<128x128xf32>
    %95 = vector.extract_strided_slice %1 {offsets = [7, 0], sizes = [1, 128], strides = [1, 1]} : vector<24x128xf32> to vector<1x128xf32>
    %96 = vector.broadcast %95 : vector<1x128xf32> to vector<128x128xf32>
    %97 = arith.addf %94, %96 : vector<128x128xf32>
    %98 = arith.truncf %97 : vector<128x128xf32> to vector<128x128xbf16>
    %c160 = arith.constant 160 : index
    %c0_29 = arith.constant 0 : index
    %99 = vector.load %arg3[%c160, %c0_29] : memref<544x256xbf16, #tpu.memory_space<vmem>>, vector<128x256xbf16>
    %cst_30 = arith.constant dense<0.000000e+00> : vector<128x256xf32>
    %100 = tpu.matmul %98, %99, %cst_30 {dimension_numbers = #tpu.dot_dimension_numbers<[1], [0], [0], [1], [0, 0, 1, 1], [], []>} : vector<128x128xbf16>, vector<128x256xbf16>, vector<128x256xf32> -> vector<128x256xf32>
    %101 = vector.extract_strided_slice %100 {offsets = [0, 0], sizes = [128, 128], strides = [1, 1]} : vector<128x256xf32> to vector<128x128xf32>
    %102 = vector.extract_strided_slice %100 {offsets = [0, 128], sizes = [128, 128], strides = [1, 1]} : vector<128x256xf32> to vector<128x128xf32>
    %103 = vector.extract_strided_slice %1 {offsets = [9, 0], sizes = [1, 128], strides = [1, 1]} : vector<24x128xf32> to vector<1x128xf32>
    %104 = vector.broadcast %103 : vector<1x128xf32> to vector<128x128xf32>
    %105 = arith.addf %102, %104 : vector<128x128xf32>
    %cst_31 = arith.constant 0.000000e+00 : f32
    %106 = vector.broadcast %cst_31 : f32 to vector<128x128xf32>
    %107 = arith.maximumf %105, %106 : vector<128x128xf32>
    %108 = arith.truncf %101 : vector<128x128xf32> to vector<128x128xbf16>
    %109 = vector.extract_strided_slice %0 {offsets = [0, 0], sizes = [16, 16], strides = [1, 1]} : vector<128x16xbf16> to vector<16x16xbf16>
    %110 = vector.extract_strided_slice %108 {offsets = [0, 0], sizes = [16, 128], strides = [1, 1]} : vector<128x128xbf16> to vector<16x128xbf16>
    %cst_32 = arith.constant dense<0.000000e+00> : vector<16x128xf32>
    %111 = tpu.matmul %109, %110, %cst_32 {dimension_numbers = #tpu.dot_dimension_numbers<[1], [0], [0], [1], [0, 0, 1, 1], [], []>} : vector<16x16xbf16>, vector<16x128xbf16>, vector<16x128xf32> -> vector<16x128xf32>
    %112 = vector.extract_strided_slice %0 {offsets = [16, 0], sizes = [16, 16], strides = [1, 1]} : vector<128x16xbf16> to vector<16x16xbf16>
    %113 = vector.extract_strided_slice %108 {offsets = [16, 0], sizes = [16, 128], strides = [1, 1]} : vector<128x128xbf16> to vector<16x128xbf16>
    %cst_33 = arith.constant dense<0.000000e+00> : vector<16x128xf32>
    %114 = tpu.matmul %112, %113, %cst_33 {dimension_numbers = #tpu.dot_dimension_numbers<[1], [0], [0], [1], [0, 0, 1, 1], [], []>} : vector<16x16xbf16>, vector<16x128xbf16>, vector<16x128xf32> -> vector<16x128xf32>
    %115 = vector.extract_strided_slice %0 {offsets = [32, 0], sizes = [16, 16], strides = [1, 1]} : vector<128x16xbf16> to vector<16x16xbf16>
    %116 = vector.extract_strided_slice %108 {offsets = [32, 0], sizes = [16, 128], strides = [1, 1]} : vector<128x128xbf16> to vector<16x128xbf16>
    %cst_34 = arith.constant dense<0.000000e+00> : vector<16x128xf32>
    %117 = tpu.matmul %115, %116, %cst_34 {dimension_numbers = #tpu.dot_dimension_numbers<[1], [0], [0], [1], [0, 0, 1, 1], [], []>} : vector<16x16xbf16>, vector<16x128xbf16>, vector<16x128xf32> -> vector<16x128xf32>
    %118 = vector.extract_strided_slice %0 {offsets = [48, 0], sizes = [16, 16], strides = [1, 1]} : vector<128x16xbf16> to vector<16x16xbf16>
    %119 = vector.extract_strided_slice %108 {offsets = [48, 0], sizes = [16, 128], strides = [1, 1]} : vector<128x128xbf16> to vector<16x128xbf16>
    %cst_35 = arith.constant dense<0.000000e+00> : vector<16x128xf32>
    %120 = tpu.matmul %118, %119, %cst_35 {dimension_numbers = #tpu.dot_dimension_numbers<[1], [0], [0], [1], [0, 0, 1, 1], [], []>} : vector<16x16xbf16>, vector<16x128xbf16>, vector<16x128xf32> -> vector<16x128xf32>
    %121 = vector.extract_strided_slice %0 {offsets = [64, 0], sizes = [16, 16], strides = [1, 1]} : vector<128x16xbf16> to vector<16x16xbf16>
    %122 = vector.extract_strided_slice %108 {offsets = [64, 0], sizes = [16, 128], strides = [1, 1]} : vector<128x128xbf16> to vector<16x128xbf16>
    %cst_36 = arith.constant dense<0.000000e+00> : vector<16x128xf32>
    %123 = tpu.matmul %121, %122, %cst_36 {dimension_numbers = #tpu.dot_dimension_numbers<[1], [0], [0], [1], [0, 0, 1, 1], [], []>} : vector<16x16xbf16>, vector<16x128xbf16>, vector<16x128xf32> -> vector<16x128xf32>
    %124 = vector.extract_strided_slice %0 {offsets = [80, 0], sizes = [16, 16], strides = [1, 1]} : vector<128x16xbf16> to vector<16x16xbf16>
    %125 = vector.extract_strided_slice %108 {offsets = [80, 0], sizes = [16, 128], strides = [1, 1]} : vector<128x128xbf16> to vector<16x128xbf16>
    %cst_37 = arith.constant dense<0.000000e+00> : vector<16x128xf32>
    %126 = tpu.matmul %124, %125, %cst_37 {dimension_numbers = #tpu.dot_dimension_numbers<[1], [0], [0], [1], [0, 0, 1, 1], [], []>} : vector<16x16xbf16>, vector<16x128xbf16>, vector<16x128xf32> -> vector<16x128xf32>
    %127 = vector.extract_strided_slice %0 {offsets = [96, 0], sizes = [16, 16], strides = [1, 1]} : vector<128x16xbf16> to vector<16x16xbf16>
    %128 = vector.extract_strided_slice %108 {offsets = [96, 0], sizes = [16, 128], strides = [1, 1]} : vector<128x128xbf16> to vector<16x128xbf16>
    %cst_38 = arith.constant dense<0.000000e+00> : vector<16x128xf32>
    %129 = tpu.matmul %127, %128, %cst_38 {dimension_numbers = #tpu.dot_dimension_numbers<[1], [0], [0], [1], [0, 0, 1, 1], [], []>} : vector<16x16xbf16>, vector<16x128xbf16>, vector<16x128xf32> -> vector<16x128xf32>
    %130 = vector.extract_strided_slice %0 {offsets = [112, 0], sizes = [16, 16], strides = [1, 1]} : vector<128x16xbf16> to vector<16x16xbf16>
    %131 = vector.extract_strided_slice %108 {offsets = [112, 0], sizes = [16, 128], strides = [1, 1]} : vector<128x128xbf16> to vector<16x128xbf16>
    %cst_39 = arith.constant dense<0.000000e+00> : vector<16x128xf32>
    %132 = tpu.matmul %130, %131, %cst_39 {dimension_numbers = #tpu.dot_dimension_numbers<[1], [0], [0], [1], [0, 0, 1, 1], [], []>} : vector<16x16xbf16>, vector<16x128xbf16>, vector<16x128xf32> -> vector<16x128xf32>
    %133 = tpu.concatenate %111, %114, %117, %120, %123, %126, %129, %132 in 0 : vector<16x128xf32>, vector<16x128xf32>, vector<16x128xf32>, vector<16x128xf32>, vector<16x128xf32>, vector<16x128xf32>, vector<16x128xf32>, vector<16x128xf32> -> vector<128x128xf32>
    %134 = vector.extract_strided_slice %1 {offsets = [8, 0], sizes = [1, 128], strides = [1, 1]} : vector<24x128xf32> to vector<1x128xf32>
    %135 = vector.broadcast %134 : vector<1x128xf32> to vector<128x128xf32>
    %136 = arith.addf %133, %135 : vector<128x128xf32>
    %cst_40 = arith.constant 0.000000e+00 : f32
    %137 = vector.broadcast %cst_40 : f32 to vector<128x128xf32>
    %138 = arith.maximumf %136, %137 : vector<128x128xf32>
    %139 = arith.addf %138, %107 : vector<128x128xf32>
    %140 = vector.extract_strided_slice %1 {offsets = [10, 0], sizes = [1, 128], strides = [1, 1]} : vector<24x128xf32> to vector<1x128xf32>
    %141 = vector.broadcast %140 : vector<1x128xf32> to vector<128x128xf32>
    %142 = arith.mulf %139, %141 : vector<128x128xf32>
    %143 = vector.extract_strided_slice %1 {offsets = [11, 0], sizes = [1, 128], strides = [1, 1]} : vector<24x128xf32> to vector<1x128xf32>
    %144 = vector.broadcast %143 : vector<1x128xf32> to vector<128x128xf32>
    %145 = arith.addf %142, %144 : vector<128x128xf32>
    %146 = vector.extract_strided_slice %1 {offsets = [12, 0], sizes = [1, 128], strides = [1, 1]} : vector<24x128xf32> to vector<1x128xf32>
    %147 = vector.extract_strided_slice %1 {offsets = [13, 0], sizes = [1, 1], strides = [1, 1]} : vector<24x128xf32> to vector<1x1xf32>
    %148 = vector.broadcast %146 : vector<1x128xf32> to vector<128x128xf32>
    %149 = arith.mulf %145, %148 : vector<128x128xf32>
    %cst_41 = arith.constant dense<0.000000e+00> : vector<128xf32>
    %150 = vector.multi_reduction <add>, %149, %cst_41 [1] : vector<128x128xf32> to vector<128xf32>
    %151 = vector.shape_cast %150 : vector<128xf32> to vector<128x1xf32>
    %152 = vector.broadcast %147 : vector<1x1xf32> to vector<128x1xf32>
    %153 = arith.addf %151, %152 : vector<128x1xf32>
    %154 = arith.negf %153 : vector<128x1xf32>
    %155 = math.exp %154 : vector<128x1xf32>
    %cst_42 = arith.constant 1.000000e+00 : f32
    %156 = vector.broadcast %cst_42 : f32 to vector<128x1xf32>
    %157 = arith.addf %156, %155 : vector<128x1xf32>
    %158 = arith.divf %156, %157 : vector<128x1xf32>
    %159 = vector.broadcast %158 : vector<128x1xf32> to vector<128x128xf32>
    %160 = arith.mulf %159, %145 : vector<128x128xf32>
    %161 = vector.extract_strided_slice %160 {offsets = [0, 0], sizes = [16, 128], strides = [1, 1]} : vector<128x128xf32> to vector<16x128xf32>
    %cst_43 = arith.constant dense<0.000000e+00> : vector<128xf32>
    %162 = vector.multi_reduction <add>, %161, %cst_43 [0] : vector<16x128xf32> to vector<128xf32>
    %163 = vector.shape_cast %162 : vector<128xf32> to vector<1x128xf32>
    %164 = vector.extract_strided_slice %160 {offsets = [16, 0], sizes = [16, 128], strides = [1, 1]} : vector<128x128xf32> to vector<16x128xf32>
    %cst_44 = arith.constant dense<0.000000e+00> : vector<128xf32>
    %165 = vector.multi_reduction <add>, %164, %cst_44 [0] : vector<16x128xf32> to vector<128xf32>
    %166 = vector.shape_cast %165 : vector<128xf32> to vector<1x128xf32>
    %167 = vector.extract_strided_slice %160 {offsets = [32, 0], sizes = [16, 128], strides = [1, 1]} : vector<128x128xf32> to vector<16x128xf32>
    %cst_45 = arith.constant dense<0.000000e+00> : vector<128xf32>
    %168 = vector.multi_reduction <add>, %167, %cst_45 [0] : vector<16x128xf32> to vector<128xf32>
    %169 = vector.shape_cast %168 : vector<128xf32> to vector<1x128xf32>
    %170 = vector.extract_strided_slice %160 {offsets = [48, 0], sizes = [16, 128], strides = [1, 1]} : vector<128x128xf32> to vector<16x128xf32>
    %cst_46 = arith.constant dense<0.000000e+00> : vector<128xf32>
    %171 = vector.multi_reduction <add>, %170, %cst_46 [0] : vector<16x128xf32> to vector<128xf32>
    %172 = vector.shape_cast %171 : vector<128xf32> to vector<1x128xf32>
    %173 = vector.extract_strided_slice %160 {offsets = [64, 0], sizes = [16, 128], strides = [1, 1]} : vector<128x128xf32> to vector<16x128xf32>
    %cst_47 = arith.constant dense<0.000000e+00> : vector<128xf32>
    %174 = vector.multi_reduction <add>, %173, %cst_47 [0] : vector<16x128xf32> to vector<128xf32>
    %175 = vector.shape_cast %174 : vector<128xf32> to vector<1x128xf32>
    %176 = vector.extract_strided_slice %160 {offsets = [80, 0], sizes = [16, 128], strides = [1, 1]} : vector<128x128xf32> to vector<16x128xf32>
    %cst_48 = arith.constant dense<0.000000e+00> : vector<128xf32>
    %177 = vector.multi_reduction <add>, %176, %cst_48 [0] : vector<16x128xf32> to vector<128xf32>
    %178 = vector.shape_cast %177 : vector<128xf32> to vector<1x128xf32>
    %179 = vector.extract_strided_slice %160 {offsets = [96, 0], sizes = [16, 128], strides = [1, 1]} : vector<128x128xf32> to vector<16x128xf32>
    %cst_49 = arith.constant dense<0.000000e+00> : vector<128xf32>
    %180 = vector.multi_reduction <add>, %179, %cst_49 [0] : vector<16x128xf32> to vector<128xf32>
    %181 = vector.shape_cast %180 : vector<128xf32> to vector<1x128xf32>
    %182 = vector.extract_strided_slice %160 {offsets = [112, 0], sizes = [16, 128], strides = [1, 1]} : vector<128x128xf32> to vector<16x128xf32>
    %cst_50 = arith.constant dense<0.000000e+00> : vector<128xf32>
    %183 = vector.multi_reduction <add>, %182, %cst_50 [0] : vector<16x128xf32> to vector<128xf32>
    %184 = vector.shape_cast %183 : vector<128xf32> to vector<1x128xf32>
    %185 = tpu.concatenate %163, %166, %169, %172, %175, %178, %181, %184 in 0 : vector<1x128xf32>, vector<1x128xf32>, vector<1x128xf32>, vector<1x128xf32>, vector<1x128xf32>, vector<1x128xf32>, vector<1x128xf32>, vector<1x128xf32> -> vector<8x128xf32>
    %186 = vector.extract_strided_slice %145 {offsets = [0, 0], sizes = [16, 128], strides = [1, 1]} : vector<128x128xf32> to vector<16x128xf32>
    %cst_51 = arith.constant dense<0xFF800000> : vector<128xf32>
    %187 = vector.multi_reduction <maximumf>, %186, %cst_51 [0] : vector<16x128xf32> to vector<128xf32>
    %188 = vector.shape_cast %187 : vector<128xf32> to vector<1x128xf32>
    %189 = vector.extract_strided_slice %145 {offsets = [16, 0], sizes = [16, 128], strides = [1, 1]} : vector<128x128xf32> to vector<16x128xf32>
    %cst_52 = arith.constant dense<0xFF800000> : vector<128xf32>
    %190 = vector.multi_reduction <maximumf>, %189, %cst_52 [0] : vector<16x128xf32> to vector<128xf32>
    %191 = vector.shape_cast %190 : vector<128xf32> to vector<1x128xf32>
    %192 = vector.extract_strided_slice %145 {offsets = [32, 0], sizes = [16, 128], strides = [1, 1]} : vector<128x128xf32> to vector<16x128xf32>
    %cst_53 = arith.constant dense<0xFF800000> : vector<128xf32>
    %193 = vector.multi_reduction <maximumf>, %192, %cst_53 [0] : vector<16x128xf32> to vector<128xf32>
    %194 = vector.shape_cast %193 : vector<128xf32> to vector<1x128xf32>
    %195 = vector.extract_strided_slice %145 {offsets = [48, 0], sizes = [16, 128], strides = [1, 1]} : vector<128x128xf32> to vector<16x128xf32>
    %cst_54 = arith.constant dense<0xFF800000> : vector<128xf32>
    %196 = vector.multi_reduction <maximumf>, %195, %cst_54 [0] : vector<16x128xf32> to vector<128xf32>
    %197 = vector.shape_cast %196 : vector<128xf32> to vector<1x128xf32>
    %198 = vector.extract_strided_slice %145 {offsets = [64, 0], sizes = [16, 128], strides = [1, 1]} : vector<128x128xf32> to vector<16x128xf32>
    %cst_55 = arith.constant dense<0xFF800000> : vector<128xf32>
    %199 = vector.multi_reduction <maximumf>, %198, %cst_55 [0] : vector<16x128xf32> to vector<128xf32>
    %200 = vector.shape_cast %199 : vector<128xf32> to vector<1x128xf32>
    %201 = vector.extract_strided_slice %145 {offsets = [80, 0], sizes = [16, 128], strides = [1, 1]} : vector<128x128xf32> to vector<16x128xf32>
    %cst_56 = arith.constant dense<0xFF800000> : vector<128xf32>
    %202 = vector.multi_reduction <maximumf>, %201, %cst_56 [0] : vector<16x128xf32> to vector<128xf32>
    %203 = vector.shape_cast %202 : vector<128xf32> to vector<1x128xf32>
    %204 = vector.extract_strided_slice %145 {offsets = [96, 0], sizes = [16, 128], strides = [1, 1]} : vector<128x128xf32> to vector<16x128xf32>
    %cst_57 = arith.constant dense<0xFF800000> : vector<128xf32>
    %205 = vector.multi_reduction <maximumf>, %204, %cst_57 [0] : vector<16x128xf32> to vector<128xf32>
    %206 = vector.shape_cast %205 : vector<128xf32> to vector<1x128xf32>
    %207 = vector.extract_strided_slice %145 {offsets = [112, 0], sizes = [16, 128], strides = [1, 1]} : vector<128x128xf32> to vector<16x128xf32>
    %cst_58 = arith.constant dense<0xFF800000> : vector<128xf32>
    %208 = vector.multi_reduction <maximumf>, %207, %cst_58 [0] : vector<16x128xf32> to vector<128xf32>
    %209 = vector.shape_cast %208 : vector<128xf32> to vector<1x128xf32>
    %210 = tpu.concatenate %188, %191, %194, %197, %200, %203, %206, %209 in 0 : vector<1x128xf32>, vector<1x128xf32>, vector<1x128xf32>, vector<1x128xf32>, vector<1x128xf32>, vector<1x128xf32>, vector<1x128xf32>, vector<1x128xf32> -> vector<8x128xf32>
    %c288 = arith.constant 288 : index
    %c0_59 = arith.constant 0 : index
    %211 = vector.load %arg3[%c288, %c0_59] : memref<544x256xbf16, #tpu.memory_space<vmem>>, vector<128x128xbf16>
    %c416 = arith.constant 416 : index
    %c0_60 = arith.constant 0 : index
    %212 = vector.load %arg3[%c416, %c0_60] : memref<544x256xbf16, #tpu.memory_space<vmem>>, vector<128x128xbf16>
    %213 = arith.truncf %185 : vector<8x128xf32> to vector<8x128xbf16>
    %cst_61 = arith.constant dense<0.000000e+00> : vector<8x128xf32>
    %214 = tpu.matmul %213, %211, %cst_61 {dimension_numbers = #tpu.dot_dimension_numbers<[1], [0], [0], [1], [0, 0, 1, 1], [], []>} : vector<8x128xbf16>, vector<128x128xbf16>, vector<8x128xf32> -> vector<8x128xf32>
    %215 = arith.truncf %210 : vector<8x128xf32> to vector<8x128xbf16>
    %cst_62 = arith.constant dense<0.000000e+00> : vector<8x128xf32>
    %216 = tpu.matmul %215, %212, %cst_62 {dimension_numbers = #tpu.dot_dimension_numbers<[1], [0], [0], [1], [0, 0, 1, 1], [], []>} : vector<8x128xbf16>, vector<128x128xbf16>, vector<8x128xf32> -> vector<8x128xf32>
    %217 = arith.addf %214, %216 : vector<8x128xf32>
    %218 = vector.extract_strided_slice %1 {offsets = [14, 0], sizes = [1, 128], strides = [1, 1]} : vector<24x128xf32> to vector<1x128xf32>
    %219 = vector.broadcast %218 : vector<1x128xf32> to vector<8x128xf32>
    %220 = arith.addf %217, %219 : vector<8x128xf32>
    %cst_63 = arith.constant 0.000000e+00 : f32
    %221 = vector.broadcast %cst_63 : f32 to vector<8x128xf32>
    %222 = arith.maximumf %220, %221 : vector<8x128xf32>
    %223 = vector.extract_strided_slice %1 {offsets = [15, 0], sizes = [1, 128], strides = [1, 1]} : vector<24x128xf32> to vector<1x128xf32>
    %224 = vector.broadcast %223 : vector<1x128xf32> to vector<8x128xf32>
    %225 = arith.mulf %222, %224 : vector<8x128xf32>
    %226 = vector.extract_strided_slice %1 {offsets = [16, 0], sizes = [1, 128], strides = [1, 1]} : vector<24x128xf32> to vector<1x128xf32>
    %227 = vector.broadcast %226 : vector<1x128xf32> to vector<8x128xf32>
    %228 = arith.addf %225, %227 : vector<8x128xf32>
    %229 = vector.extract_strided_slice %1 {offsets = [17, 0], sizes = [1, 128], strides = [1, 1]} : vector<24x128xf32> to vector<1x128xf32>
    %230 = vector.broadcast %229 : vector<1x128xf32> to vector<8x128xf32>
    %231 = arith.mulf %228, %230 : vector<8x128xf32>
    %cst_64 = arith.constant dense<0.000000e+00> : vector<8xf32>
    %232 = vector.multi_reduction <add>, %231, %cst_64 [1] : vector<8x128xf32> to vector<8xf32>
    %233 = vector.shape_cast %232 : vector<8xf32> to vector<8x1xf32>
    %234 = vector.extract_strided_slice %1 {offsets = [18, 0], sizes = [1, 1], strides = [1, 1]} : vector<24x128xf32> to vector<1x1xf32>
    %235 = vector.broadcast %234 : vector<1x1xf32> to vector<8x1xf32>
    %236 = arith.addf %233, %235 : vector<8x1xf32>
    %237 = vector.shape_cast %236 : vector<8x1xf32> to vector<8x1xf32>
    %238 = vector.broadcast %237 : vector<8x1xf32> to vector<8x128xf32>
    %c0_65 = arith.constant 0 : index
    %c0_66 = arith.constant 0 : index
    %239 = vector.load %arg5[%c0_65, %c0_66] : memref<8x128xf32, #tpu.memory_space<vmem>>, vector<8x128xf32>
    tpu.vector_store %arg5[%c0_65, %c0_66], %238 {strides = array<i32>} : memref<8x128xf32, #tpu.memory_space<vmem>>, vector<8x128xf32>,
    return
  }
  func.func @transform_0(%arg0: i32) -> (i32, i32) {
    %c0_i32 = arith.constant 0 : i32
    %c0_i32_0 = arith.constant 0 : i32
    return %arg0, %c0_i32 : i32, i32
  }
  func.func @transform_1(%arg0: i32) -> (i32, i32) {
    %c0_i32 = arith.constant 0 : i32
    %c0_i32_0 = arith.constant 0 : i32
    return %arg0, %c0_i32 : i32, i32
  }
  func.func @transform_2(%arg0: i32) -> (i32, i32) {
    %c0_i32 = arith.constant 0 : i32
    %c0_i32_0 = arith.constant 0 : i32
    %c0_i32_1 = arith.constant 0 : i32
    return %c0_i32, %c0_i32_0 : i32, i32
  }
  func.func @transform_3(%arg0: i32) -> (i32, i32) {
    %c0_i32 = arith.constant 0 : i32
    %c0_i32_0 = arith.constant 0 : i32
    %c0_i32_1 = arith.constant 0 : i32
    return %c0_i32, %c0_i32_0 : i32, i32
  }
  func.func @transform_4(%arg0: i32) -> (i32, i32) {
    %c0_i32 = arith.constant 0 : i32
    %c0_i32_0 = arith.constant 0 : i32
    return %arg0, %c0_i32 : i32, i32
  }
}

</mosaic_0001>

<llo_original>
// kernel: gcn_predictor_forward.1
$region0: #{gcn_predictor_forward.1}
  #allocation0 [shape = 'u32[]', space=smem, size = 0x4, offset = 0x4, fixed_abs, tag = 'smem constant byte address 0x4 - core index']
  #allocation1 [shape = 'u32[72,128]{1,0:T(1,128)}', space=vmem, size = 0x9000, scoped, tag = 'internal scratch']
  %s0 = inlined_call_operand.vmem [shape: bf16[256,16], index: 0, kind: input, shape index: {}]
  %s1 = inlined_call_operand.vmem [shape: bf16[256,32], index: 1, kind: input, shape index: {}]
  %s2 = inlined_call_operand.vmem [shape: bf16[544,256], index: 2, kind: input, shape index: {}]
  %s3 = inlined_call_operand.vmem [shape: f32[24,128], index: 3, kind: input, shape index: {}]
  %s4 = inlined_call_operand.vmem [shape: f32[16,128], index: 4, kind: output, shape index: {}]
  %s5 = sld [smem:[#allocation0]]
  $region49: #{gcn_predictor_forward.1} parent=0
    _
  %s7 = ssub.s32 1, %s5
  %s8 = scalar_select 0, %s7, %s5
  loop: start=0, step=1, limit=4
  $region2: #{gcn_predictor_forward.1} parent=0 // loop_pre_header
    _
  $region3: #{gcn_predictor_forward.1} parent=0 // loop_header
    %s10 = sphi 0, %s14
    %p11 = scmp.ge.s32.totalorder %s10, 4
    %s20 = sphi 0, %s22
    %s23 = sphi 0, %s20
    %s24 = sphi 0, %s23
    %s40 = sphi 0, %s24
    %s46 = sphi 0, %s48
    %s49 = sphi 0, %s46
    %s50 = sphi 0, %s49
    %s66 = sphi 0, %s50
    %s70 = sphi 0, %s70
    %s72 = sphi 0, %s70
    %s73 = sphi 0, %s72
    %s87 = sphi 0, %s73
    %s91 = sphi 0, %s91
    %s93 = sphi 0, %s91
    %s94 = sphi 0, %s93
    %s108 = sphi 0, %s94
    %s114 = sphi 0, %s116
    %s117 = sphi 0, %s114
    %s118 = sphi 0, %s117
    %s134 = sphi 0, %s118
  $region4: #{gcn_predictor_forward.1} parent=0 // loop_header_branch
    %13 = sbr.rel (%p11) target = $region8
  $region5: #{gcn_predictor_forward.1} parent=0 // loop_body
    %s15 = ssub.s32 %s10, 1
    %s16 = ssub.s32 %s10, 2
    %s17 = sadd.s32 %s10, 1
    %s18 = ssub.s32 %s10, %s17
    %p19 = scmp.eq.s32.totalorder %s18, 0
    %s21 = sadd.s32 %s20, 1
    %s22 = scalar_select %p19, %s20, %s21
    %p25 = pneg %p19
    %p26 = scmp.eq.s32.totalorder %s10, 1
    %p27 = por %p25, %p26
    %p28 = scmp.ne.s32.totalorder %s20, %s23
    %p29 = scmp.eq.s32.totalorder %s10, 0
    %p30 = por %p28, %p29
    %p31 = scmp.ne.s32.totalorder %s20, %s23
    %p32 = scmp.eq.s32.totalorder %s15, 1
    %p33 = por %p31, %p32
    %p34 = scmp.ne.s32.totalorder %s23, %s24
    %p35 = scmp.eq.s32.totalorder %s15, 0
    %p36 = por %p34, %p35
    %p37 = scmp.ne.s32.totalorder %s23, %s24
    %p38 = scmp.eq.s32.totalorder %s16, 1
    %p39 = por %p37, %p38
    %p41 = scmp.ne.s32.totalorder %s24, %s40
    %p42 = scmp.eq.s32.totalorder %s16, 0
    %p43 = por %p41, %p42
    %s44 = ssub.s32 %s10, %s17
    %p45 = scmp.eq.s32.totalorder %s44, 0
    %s47 = sadd.s32 %s46, 1
    %s48 = scalar_select %p45, %s46, %s47
    %p51 = pneg %p45
    %p52 = scmp.eq.s32.totalorder %s10, 1
    %p53 = por %p51, %p52
    %p54 = scmp.ne.s32.totalorder %s46, %s49
    %p55 = scmp.eq.s32.totalorder %s10, 0
    %p56 = por %p54, %p55
    %p57 = scmp.ne.s32.totalorder %s46, %s49
    %p58 = scmp.eq.s32.totalorder %s15, 1
    %p59 = por %p57, %p58
    %p60 = scmp.ne.s32.totalorder %s49, %s50
    %p61 = scmp.eq.s32.totalorder %s15, 0
    %p62 = por %p60, %p61
    %p63 = scmp.ne.s32.totalorder %s49, %s50
    %p64 = scmp.eq.s32.totalorder %s16, 1
    %p65 = por %p63, %p64
    %p67 = scmp.ne.s32.totalorder %s50, %s66
    %p68 = scmp.eq.s32.totalorder %s16, 0
    %p69 = por %p67, %p68
    %s71 = sadd.s32 %s70, 1
    %p74 = scmp.eq.s32.totalorder %s10, 1
    %p75 = scmp.ne.s32.totalorder %s70, %s72
    %p76 = scmp.eq.s32.totalorder %s10, 0
    %p77 = por %p75, %p76
    %p78 = scmp.ne.s32.totalorder %s70, %s72
    %p79 = scmp.eq.s32.totalorder %s15, 1
    %p80 = por %p78, %p79
    %p81 = scmp.ne.s32.totalorder %s72, %s73
    %p82 = scmp.eq.s32.totalorder %s15, 0
    %p83 = por %p81, %p82
    %p84 = scmp.ne.s32.totalorder %s72, %s73
    %p85 = scmp.eq.s32.totalorder %s16, 1
    %p86 = por %p84, %p85
    %p88 = scmp.ne.s32.totalorder %s73, %s87
    %p89 = scmp.eq.s32.totalorder %s16, 0
    %p90 = por %p88, %p89
    %s92 = sadd.s32 %s91, 1
    %p95 = scmp.eq.s32.totalorder %s10, 1
    %p96 = scmp.ne.s32.totalorder %s91, %s93
    %p97 = scmp.eq.s32.totalorder %s10, 0
    %p98 = por %p96, %p97
    %p99 = scmp.ne.s32.totalorder %s91, %s93
    %p100 = scmp.eq.s32.totalorder %s15, 1
    %p101 = por %p99, %p100
    %p102 = scmp.ne.s32.totalorder %s93, %s94
    %p103 = scmp.eq.s32.totalorder %s15, 0
    %p104 = por %p102, %p103
    %p105 = scmp.ne.s32.totalorder %s93, %s94
    %p106 = scmp.eq.s32.totalorder %s16, 1
    %p107 = por %p105, %p106
    %p109 = scmp.ne.s32.totalorder %s94, %s108
    %p110 = scmp.eq.s32.totalorder %s16, 0
    %p111 = por %p109, %p110
    %s112 = ssub.s32 %s10, %s17
    %p113 = scmp.eq.s32.totalorder %s112, 0
    %s115 = sadd.s32 %s114, 1
    %s116 = scalar_select %p113, %s114, %s115
    %p119 = pneg %p113
    %p120 = scmp.eq.s32.totalorder %s10, 1
    %p121 = por %p119, %p120
    %p122 = scmp.ne.s32.totalorder %s114, %s117
    %p123 = scmp.eq.s32.totalorder %s10, 0
    %p124 = por %p122, %p123
    %p125 = scmp.ne.s32.totalorder %s114, %s117
    %p126 = scmp.eq.s32.totalorder %s15, 1
    %p127 = por %p125, %p126
    %p128 = scmp.ne.s32.totalorder %s117, %s118
    %p129 = scmp.eq.s32.totalorder %s15, 0
    %p130 = por %p128, %p129
    %p131 = scmp.ne.s32.totalorder %s117, %s118
    %p132 = scmp.eq.s32.totalorder %s16, 1
    %p133 = por %p131, %p132
    %p135 = scmp.ne.s32.totalorder %s118, %s134
    %p136 = scmp.eq.s32.totalorder %s16, 0
    %p137 = por %p135, %p136
    %p138 = scmp.le.s32.totalorder 1, %s10
    %p139 = scmp.lt.s32.totalorder %s10, 3
    %p140 = pnand %p138, %p139
    %p141 = pneg %p140
    // Predicated region
    $region9: #{gcn_predictor_forward.1} parent=5 // pred_check
      _
    $region10: #{gcn_predictor_forward.1} parent=5 // pred_check_branch
      %143 = sbr.rel (%p140) target = $region12
    $region11: #{gcn_predictor_forward.1} parent=5 // pred_region
      %s144 = ssub.s32 %s10, 1
      // Predicated region
      $region13: #{gcn_predictor_forward.1} parent=11 // pred_check
        %p145 = pneg %p83
      $region14: #{gcn_predictor_forward.1} parent=11 // pred_check_branch
        %147 = sbr.rel (%p145) target = $region16
      $region15: #{gcn_predictor_forward.1} parent=11 // pred_region
        _
      $region16: #{gcn_predictor_forward.1} parent=11 // pred_fallthru
        _
      // Predicated region
      $region17: #{gcn_predictor_forward.1} parent=11 // pred_check
        %p148 = pneg %p104
      $region18: #{gcn_predictor_forward.1} parent=11 // pred_check_branch
        %150 = sbr.rel (%p148) target = $region20
      $region19: #{gcn_predictor_forward.1} parent=11 // pred_region
        _
      $region20: #{gcn_predictor_forward.1} parent=11 // pred_fallthru
        _
    $region12: #{gcn_predictor_forward.1} parent=5 // pred_fallthru
      _
    %p151 = scmp.lt.s32.totalorder %s10, 2
    // Predicated region
    $region21: #{gcn_predictor_forward.1} parent=5 // pred_check
      %p152 = pneg %p151
    $region22: #{gcn_predictor_forward.1} parent=5 // pred_check_branch
      %154 = sbr.rel (%p152) target = $region24
    $region23: #{gcn_predictor_forward.1} parent=5 // pred_region
      // Predicated region
      $region25: #{gcn_predictor_forward.1} parent=23 // pred_check
        %p155 = pneg %p30
      $region26: #{gcn_predictor_forward.1} parent=23 // pred_check_branch
        %157 = sbr.rel (%p155) target = $region28
      $region27: #{gcn_predictor_forward.1} parent=23 // pred_region
        %s158 = smul.u32 16, %s10
        %p159 = scmp.lt.s32.totalorder %s158, 31
        %s160 = scalar_select %p159, %s158, 31
        %s161 = smul.addr %s160, 4
        %s162 = scalar_lea.vmem %s0, %s161
        %s163 = smul.u32 16, %s10
      $region28: #{gcn_predictor_forward.1} parent=23 // pred_fallthru
        _
      // Predicated region
      $region29: #{gcn_predictor_forward.1} parent=23 // pred_check
        %p164 = pneg %p56
      $region30: #{gcn_predictor_forward.1} parent=23 // pred_check_branch
        %166 = sbr.rel (%p164) target = $region32
      $region31: #{gcn_predictor_forward.1} parent=23 // pred_region
        %s167 = smul.u32 16, %s10
        %p168 = scmp.lt.s32.totalorder %s167, 31
        %s169 = scalar_select %p168, %s167, 31
        %s170 = smul.addr %s169, 4
        %s171 = scalar_lea.vmem %s1, %s170
        %s172 = smul.u32 16, %s10
      $region32: #{gcn_predictor_forward.1} parent=23 // pred_fallthru
        _
    $region24: #{gcn_predictor_forward.1} parent=5 // pred_fallthru
      _
    %p173 = scmp.le.s32.totalorder 1, %s10
    %p174 = scmp.lt.s32.totalorder %s10, 3
    %p175 = pnand %p173, %p174
    %p176 = pneg %p175
    // Predicated region
    $region33: #{gcn_predictor_forward.1} parent=5 // pred_check
      _
    $region34: #{gcn_predictor_forward.1} parent=5 // pred_check_branch
      %178 = sbr.rel (%p175) target = $region36
    $region35: #{gcn_predictor_forward.1} parent=5 // pred_region
      %s179 = ssub.s32 %s10, 1
      %s180 = smul.u32 16, %s15
      %p181 = scmp.lt.s32.totalorder %s180, 31
      %s182 = scalar_select %p181, %s180, 31
      %s183 = smul.addr %s182, 4
      %s184 = scalar_lea.vmem %s0, %s183
      %p185 = pneg %p36
      %p186 = pneg %p33
      %s187 = smul.u32 16, %s15
      %p188 = scmp.lt.s32.totalorder %s187, 31
      %s189 = scalar_select %p188, %s187, 31
      %s190 = smul.addr %s189, 4
      %s191 = scalar_lea.vmem %s1, %s190
      %p192 = pneg %p62
      %p193 = pneg %p59
      %p194 = pneg %p83
      %p195 = pneg %p80
      %p196 = pneg %p104
      %p197 = pneg %p101
      %p198 = pneg %p130
      %p199 = pneg %p127
      %p200 = scmp.lt.s32.totalorder %s15, 1
      %s201 = scalar_select %p200, %s15, 1
      %s202 = smul.addr %s201, 8
      %s203 = scalar_lea.vmem %s4, %s202
      %s204 = smul.u32 16, %s15
      %p205 = scmp.lt.s32.totalorder %s204, 31
      %s206 = scalar_select %p205, %s204, 31
      %s207 = smul.addr %s206, 4
      %s208 = scalar_lea.vmem %s0, %s207
      %s209 = smul.u32 16, %s15
      %s210 = smul.u32 16, %s15
      %p211 = scmp.lt.s32.totalorder %s210, 31
      %s212 = scalar_select %p211, %s210, 31
      %s213 = smul.addr %s212, 4
      %s214 = scalar_lea.vmem %s1, %s213
      %s215 = smul.u32 16, %s15
      %p216 = scmp.lt.s32.totalorder %s15, 1
      %s217 = scalar_select %p216, %s15, 1
      %s218 = smul.addr %s217, 8
      %s219 = scalar_lea.vmem %s4, %s218
      %v221 = vld [vmem:[%s208] sm:$0xf]
      %v222 = vld [vmem:[%s208 + $0x4] sm:$0xf]
      %v223 = vld [vmem:[%s208 + $0x8] sm:$0xf]
      %v224 = vld [vmem:[%s208 + $0xc] sm:$0xf]
      %v225 = vld [vmem:[%s208 + $0x10] sm:$0xf]
      %v226 = vld [vmem:[%s208 + $0x14] sm:$0xf]
      %v227 = vld [vmem:[%s208 + $0x18] sm:$0xf]
      %v228 = vld [vmem:[%s208 + $0x1c] sm:$0xf]
      %v229 = vld [vmem:[%s208 + $0x20] sm:$0xf]
      %v230 = vld [vmem:[%s208 + $0x24] sm:$0xf]
      %v231 = vld [vmem:[%s208 + $0x28] sm:$0xf]
      %v232 = vld [vmem:[%s208 + $0x2c] sm:$0xf]
      %v233 = vld [vmem:[%s208 + $0x30] sm:$0xf]
      %v234 = vld [vmem:[%s208 + $0x34] sm:$0xf]
      %v235 = vld [vmem:[%s208 + $0x38] sm:$0xf]
      %v236 = vld [vmem:[%s208 + $0x3c] sm:$0xf]
      %v237 = vld [vmem:[%s3] sm:$0xff]
      %v238 = vld [vmem:[%s3 + $0x8] sm:$0xff]
      %v239 = vld [vmem:[%s3 + $0x10] sm:$0xff]
      %v240 = vld [vmem:[%s214] sm:$0xf]
      %v241 = vld [vmem:[%s214 + $0x4] sm:$0xf]
      %v242 = vld [vmem:[%s214 + $0x8] sm:$0xf]
      %v243 = vld [vmem:[%s214 + $0xc] sm:$0xf]
      %v244 = vld [vmem:[%s214 + $0x10] sm:$0xf]
      %v245 = vld [vmem:[%s214 + $0x14] sm:$0xf]
      %v246 = vld [vmem:[%s214 + $0x18] sm:$0xf]
      %v247 = vld [vmem:[%s214 + $0x1c] sm:$0xf]
      %v248 = vld [vmem:[%s214 + $0x20] sm:$0xf]
      %v249 = vld [vmem:[%s214 + $0x24] sm:$0xf]
      %v250 = vld [vmem:[%s214 + $0x28] sm:$0xf]
      %v251 = vld [vmem:[%s214 + $0x2c] sm:$0xf]
      %v252 = vld [vmem:[%s214 + $0x30] sm:$0xf]
      %v253 = vld [vmem:[%s214 + $0x34] sm:$0xf]
      %v254 = vld [vmem:[%s214 + $0x38] sm:$0xf]
      %v255 = vld [vmem:[%s214 + $0x3c] sm:$0xf]
      %v256 = vld [vmem:[%s2] sm:$0xff]
      %v257 = vld [vmem:[%s2 + $0x8] sm:$0xff]
      %v258 = vld [vmem:[%s2 + $0x10] sm:$0xff]
      %v259 = vld [vmem:[%s2 + $0x18] sm:$0xff]
      %v276 = vunpack.c.l.b16 %v240
      %v277 = vunpack.c.l.b16 %v241
      %v278 = vunpack.c.l.b16 %v242
      %v279 = vunpack.c.l.b16 %v243
      %v280 = vunpack.c.l.b16 %v244
      %v281 = vunpack.c.l.b16 %v245
      %v282 = vunpack.c.l.b16 %v246
      %v283 = vunpack.c.l.b16 %v247
      %v284 = vunpack.c.l.b16 %v248
      %v285 = vunpack.c.l.b16 %v249
      %v286 = vunpack.c.l.b16 %v250
      %v287 = vunpack.c.l.b16 %v251
      %v288 = vunpack.c.l.b16 %v252
      %v289 = vunpack.c.l.b16 %v253
      %v290 = vunpack.c.l.b16 %v254
      %v291 = vunpack.c.l.b16 %v255
      %v292 = vpack.c.b16 %v277, %v276
      %v293 = vpack.c.b16 %v279, %v278
      %v294 = vpack.c.b16 %v281, %v280
      %v295 = vpack.c.b16 %v283, %v282
      %v296 = vpack.c.b16 %v285, %v284
      %v297 = vpack.c.b16 %v287, %v286
      %v298 = vpack.c.b16 %v289, %v288
      %v299 = vpack.c.b16 %v291, %v290
      %v304 = vunpack.c.l.b16 %v256
      %v305 = vunpack.c.h.b16 %v256
      %v306 = vunpack.c.l.b16 %v257
      %v307 = vunpack.c.h.b16 %v257
      %v308 = vunpack.c.l.b16 %v258
      %v309 = vunpack.c.h.b16 %v258
      %v310 = vunpack.c.l.b16 %v259
      %v311 = vunpack.c.h.b16 %v259
      %v312 = vpack.c.b16 %v306, %v304
      %v313 = vpack.c.b16 %v307, %v305
      %v314 = vpack.c.b16 %v310, %v308
      %v315 = vpack.c.b16 %v311, %v309
      %vm320 = vcmask 261120
      %v322 = vsel %vm320, %v292, 0
      %v325 = vsel %vm320, %v293, 0
      %v328 = vsel %vm320, %v294, 0
      %v331 = vsel %vm320, %v295, 0
      %v334 = vsel %vm320, %v296, 0
      %v337 = vsel %vm320, %v297, 0
      %v340 = vsel %vm320, %v298, 0
      %v343 = vsel %vm320, %v299, 0
      %345 = vmatpush.bf16.msra.mxu0 0
      %346 = vmatpush.bf16.msra.mxu0 0
      %347 = vmatpush.bf16.msra.mxu0 0
      %348 = vmatpush.bf16.msra.mxu0 0
      %349 = vmatpush.bf16.msra.mxu0 0
      %350 = vmatpush.bf16.msra.mxu0 0
      %351 = vmatpush.bf16.msra.mxu0 %v314
      %352 = vmatpush.bf16.msra.mxu0 %v312
      %353 = vmatmul.bf16.gmra.mxu0 %v322
      %v354 = vpop.f32.mrf.mxu0
      %v355 = vadd.f32 0.0, %v354
      %v356 = vpop.f32.mrf.mxu0
      %v357 = vadd.f32 0.0, %v356
      %358 = vmatmul.bf16.gmra.mxu0 %v325
      %v359 = vpop.f32.mrf.mxu0
      %v360 = vadd.f32 0.0, %v359
      %v361 = vpop.f32.mrf.mxu0
      %v362 = vadd.f32 0.0, %v361
      %363 = vmatmul.bf16.gmra.mxu0 %v328
      %v364 = vpop.f32.mrf.mxu0
      %v365 = vadd.f32 0.0, %v364
      %v366 = vpop.f32.mrf.mxu0
      %v367 = vadd.f32 0.0, %v366
      %368 = vmatmul.bf16.gmra.mxu0 %v331
      %v369 = vpop.f32.mrf.mxu0
      %v370 = vadd.f32 0.0, %v369
      %v371 = vpop.f32.mrf.mxu0
      %v372 = vadd.f32 0.0, %v371
      %373 = vmatmul.bf16.gmra.mxu0 %v334
      %v374 = vpop.f32.mrf.mxu0
      %v375 = vadd.f32 0.0, %v374
      %v376 = vpop.f32.mrf.mxu0
      %v377 = vadd.f32 0.0, %v376
      %378 = vmatmul.bf16.gmra.mxu0 %v337
      %v379 = vpop.f32.mrf.mxu0
      %v380 = vadd.f32 0.0, %v379
      %v381 = vpop.f32.mrf.mxu0
      %v382 = vadd.f32 0.0, %v381
      %383 = vmatmul.bf16.gmra.mxu0 %v340
      %v384 = vpop.f32.mrf.mxu0
      %v385 = vadd.f32 0.0, %v384
      %v386 = vpop.f32.mrf.mxu0
      %v387 = vadd.f32 0.0, %v386
      %388 = vmatmul.bf16.gmra.mxu0 %v343
      %v389 = vpop.f32.mrf.mxu0
      %v390 = vadd.f32 0.0, %v389
      %v391 = vpop.f32.mrf.mxu0
      %v392 = vadd.f32 0.0, %v391
      %393 = vdwg.mxu0
      %394 = vmatpush.bf16.msra.mxu0 0
      %395 = vmatpush.bf16.msra.mxu0 0
      %396 = vmatpush.bf16.msra.mxu0 0
      %397 = vmatpush.bf16.msra.mxu0 0
      %398 = vmatpush.bf16.msra.mxu0 0
      %399 = vmatpush.bf16.msra.mxu0 0
      %400 = vmatpush.bf16.msra.mxu0 %v315
      %401 = vmatpush.bf16.msra.mxu0 %v313
      %402 = vmatmul.bf16.gmra.mxu0 %v322
      %v403 = vpop.f32.mrf.mxu0
      %v404 = vadd.f32 0.0, %v403
      %v405 = vpop.f32.mrf.mxu0
      %v406 = vadd.f32 0.0, %v405
      %407 = vmatmul.bf16.gmra.mxu0 %v325
      %v408 = vpop.f32.mrf.mxu0
      %v409 = vadd.f32 0.0, %v408
      %v410 = vpop.f32.mrf.mxu0
      %v411 = vadd.f32 0.0, %v410
      %412 = vmatmul.bf16.gmra.mxu0 %v328
      %v413 = vpop.f32.mrf.mxu0
      %v414 = vadd.f32 0.0, %v413
      %v415 = vpop.f32.mrf.mxu0
      %v416 = vadd.f32 0.0, %v415
      %417 = vmatmul.bf16.gmra.mxu0 %v331
      %v418 = vpop.f32.mrf.mxu0
      %v419 = vadd.f32 0.0, %v418
      %v420 = vpop.f32.mrf.mxu0
      %v421 = vadd.f32 0.0, %v420
      %422 = vmatmul.bf16.gmra.mxu0 %v334
      %v423 = vpop.f32.mrf.mxu0
      %v424 = vadd.f32 0.0, %v423
      %v425 = vpop.f32.mrf.mxu0
      %v426 = vadd.f32 0.0, %v425
      %427 = vmatmul.bf16.gmra.mxu0 %v337
      %v428 = vpop.f32.mrf.mxu0
      %v429 = vadd.f32 0.0, %v428
      %v430 = vpop.f32.mrf.mxu0
      %v431 = vadd.f32 0.0, %v430
      %432 = vmatmul.bf16.gmra.mxu0 %v340
      %v433 = vpop.f32.mrf.mxu0
      %v434 = vadd.f32 0.0, %v433
      %v435 = vpop.f32.mrf.mxu0
      %v436 = vadd.f32 0.0, %v435
      %437 = vmatmul.bf16.gmra.mxu0 %v343
      %v438 = vpop.f32.mrf.mxu0
      %v439 = vadd.f32 0.0, %v438
      %v440 = vpop.f32.mrf.mxu0
      %v441 = vadd.f32 0.0, %v440
      %442 = vdwg.mxu0
      %v443 = vperm.slane %v237, 1
      %v444 = vadd.f32 %v404, %v443
      %v445 = vadd.f32 %v406, %v443
      %v446 = vadd.f32 %v409, %v443
      %v447 = vadd.f32 %v411, %v443
      %v448 = vadd.f32 %v414, %v443
      %v449 = vadd.f32 %v416, %v443
      %v450 = vadd.f32 %v419, %v443
      %v451 = vadd.f32 %v421, %v443
      %v452 = vadd.f32 %v424, %v443
      %v453 = vadd.f32 %v426, %v443
      %v454 = vadd.f32 %v429, %v443
      %v455 = vadd.f32 %v431, %v443
      %v456 = vadd.f32 %v434, %v443
      %v457 = vadd.f32 %v436, %v443
      %v458 = vadd.f32 %v439, %v443
      %v459 = vadd.f32 %v441, %v443
      %v460 = vmax.f32 %v444, 0.0
      %v461 = vmax.f32 %v445, 0.0
      %v462 = vmax.f32 %v446, 0.0
      %v463 = vmax.f32 %v447, 0.0
      %v464 = vmax.f32 %v448, 0.0
      %v465 = vmax.f32 %v449, 0.0
      %v466 = vmax.f32 %v450, 0.0
      %v467 = vmax.f32 %v451, 0.0
      %v468 = vmax.f32 %v452, 0.0
      %v469 = vmax.f32 %v453, 0.0
      %v470 = vmax.f32 %v454, 0.0
      %v471 = vmax.f32 %v455, 0.0
      %v472 = vmax.f32 %v456, 0.0
      %v473 = vmax.f32 %v457, 0.0
      %v474 = vmax.f32 %v458, 0.0
      %v475 = vmax.f32 %v459, 0.0
      %v476 = vpack.c.bf16 %v355, %v355
      %v477 = vpack.c.bf16 %v357, %v357
      %v478 = vpack.c.bf16 %v360, %v360
      %v479 = vpack.c.bf16 %v362, %v362
      %v480 = vpack.c.bf16 %v365, %v365
      %v481 = vpack.c.bf16 %v367, %v367
      %v482 = vpack.c.bf16 %v370, %v370
      %v483 = vpack.c.bf16 %v372, %v372
      %v484 = vpack.c.bf16 %v375, %v375
      %v485 = vpack.c.bf16 %v377, %v377
      %v486 = vpack.c.bf16 %v380, %v380
      %v487 = vpack.c.bf16 %v382, %v382
      %v488 = vpack.c.bf16 %v385, %v385
      %v489 = vpack.c.bf16 %v387, %v387
      %v490 = vpack.c.bf16 %v390, %v390
      %v491 = vpack.c.bf16 %v392, %v392
      %v494 = vunpack.c.l.b16 %v221
      %v495 = vunpack.c.l.b16 %v222
      %v496 = vpack.c.b16 %v495, %v494
      %v499 = vunpack.c.l.b16 %v476
      %v500 = vunpack.c.l.b16 %v477
      %v501 = vpack.c.b16 %v500, %v499
      %vm503 = vcmask 130048
      %v505 = vsel %vm503, %v496, 0
      %507 = vmatpush.bf16.msra.mxu0 0
      %508 = vmatpush.bf16.msra.mxu0 0
      %509 = vmatpush.bf16.msra.mxu0 0
      %510 = vmatpush.bf16.msra.mxu0 0
      %511 = vmatpush.bf16.msra.mxu0 0
      %512 = vmatpush.bf16.msra.mxu0 0
      %513 = vmatpush.bf16.msra.mxu0 0
      %514 = vmatpush.bf16.msra.mxu0 %v501
      %515 = vmatmul.bf16.gmra.mxu0 %v505
      %v516 = vpop.f32.mrf.mxu0
      %v517 = vadd.f32 0.0, %v516
      %v518 = vpop.f32.mrf.mxu0
      %v519 = vadd.f32 0.0, %v518
      %520 = vdwg.mxu0
      %v523 = vunpack.c.l.b16 %v223
      %v524 = vunpack.c.l.b16 %v224
      %v525 = vpack.c.b16 %v524, %v523
      %v528 = vunpack.c.l.b16 %v478
      %v529 = vunpack.c.l.b16 %v479
      %v530 = vpack.c.b16 %v529, %v528
      %v533 = vsel %vm503, %v525, 0
      %535 = vmatpush.bf16.msra.mxu0 0
      %536 = vmatpush.bf16.msra.mxu0 0
      %537 = vmatpush.bf16.msra.mxu0 0
      %538 = vmatpush.bf16.msra.mxu0 0
      %539 = vmatpush.bf16.msra.mxu0 0
      %540 = vmatpush.bf16.msra.mxu0 0
      %541 = vmatpush.bf16.msra.mxu0 0
      %542 = vmatpush.bf16.msra.mxu0 %v530
      %543 = vmatmul.bf16.gmra.mxu0 %v533
      %v544 = vpop.f32.mrf.mxu0
      %v545 = vadd.f32 0.0, %v544
      %v546 = vpop.f32.mrf.mxu0
      %v547 = vadd.f32 0.0, %v546
      %548 = vdwg.mxu0
      %v551 = vunpack.c.l.b16 %v225
      %v552 = vunpack.c.l.b16 %v226
      %v553 = vpack.c.b16 %v552, %v551
      %v556 = vunpack.c.l.b16 %v480
      %v557 = vunpack.c.l.b16 %v481
      %v558 = vpack.c.b16 %v557, %v556
      %v561 = vsel %vm503, %v553, 0
      %563 = vmatpush.bf16.msra.mxu0 0
      %564 = vmatpush.bf16.msra.mxu0 0
      %565 = vmatpush.bf16.msra.mxu0 0
      %566 = vmatpush.bf16.msra.mxu0 0
      %567 = vmatpush.bf16.msra.mxu0 0
      %568 = vmatpush.bf16.msra.mxu0 0
      %569 = vmatpush.bf16.msra.mxu0 0
      %570 = vmatpush.bf16.msra.mxu0 %v558
      %571 = vmatmul.bf16.gmra.mxu0 %v561
      %v572 = vpop.f32.mrf.mxu0
      %v573 = vadd.f32 0.0, %v572
      %v574 = vpop.f32.mrf.mxu0
      %v575 = vadd.f32 0.0, %v574
      %576 = vdwg.mxu0
      %v579 = vunpack.c.l.b16 %v227
      %v580 = vunpack.c.l.b16 %v228
      %v581 = vpack.c.b16 %v580, %v579
      %v584 = vunpack.c.l.b16 %v482
      %v585 = vunpack.c.l.b16 %v483
      %v586 = vpack.c.b16 %v585, %v584
      %v589 = vsel %vm503, %v581, 0
      %591 = vmatpush.bf16.msra.mxu0 0
      %592 = vmatpush.bf16.msra.mxu0 0
      %593 = vmatpush.bf16.msra.mxu0 0
      %594 = vmatpush.bf16.msra.mxu0 0
      %595 = vmatpush.bf16.msra.mxu0 0
      %596 = vmatpush.bf16.msra.mxu0 0
      %597 = vmatpush.bf16.msra.mxu0 0
      %598 = vmatpush.bf16.msra.mxu0 %v586
      %599 = vmatmul.bf16.gmra.mxu0 %v589
      %v600 = vpop.f32.mrf.mxu0
      %v601 = vadd.f32 0.0, %v600
      %v602 = vpop.f32.mrf.mxu0
      %v603 = vadd.f32 0.0, %v602
      %604 = vdwg.mxu0
      %v607 = vunpack.c.l.b16 %v229
      %v608 = vunpack.c.l.b16 %v230
      %v609 = vpack.c.b16 %v608, %v607
      %v612 = vunpack.c.l.b16 %v484
      %v613 = vunpack.c.l.b16 %v485
      %v614 = vpack.c.b16 %v613, %v612
      %v617 = vsel %vm503, %v609, 0
      %619 = vmatpush.bf16.msra.mxu0 0
      %620 = vmatpush.bf16.msra.mxu0 0
      %621 = vmatpush.bf16.msra.mxu0 0
      %622 = vmatpush.bf16.msra.mxu0 0
      %623 = vmatpush.bf16.msra.mxu0 0
      %624 = vmatpush.bf16.msra.mxu0 0
      %625 = vmatpush.bf16.msra.mxu0 0
      %626 = vmatpush.bf16.msra.mxu0 %v614
      %627 = vmatmul.bf16.gmra.mxu0 %v617
      %v628 = vpop.f32.mrf.mxu0
      %v629 = vadd.f32 0.0, %v628
      %v630 = vpop.f32.mrf.mxu0
      %v631 = vadd.f32 0.0, %v630
      %632 = vdwg.mxu0
      %v635 = vunpack.c.l.b16 %v231
      %v636 = vunpack.c.l.b16 %v232
      %v637 = vpack.c.b16 %v636, %v635
      %v640 = vunpack.c.l.b16 %v486
      %v641 = vunpack.c.l.b16 %v487
      %v642 = vpack.c.b16 %v641, %v640
      %v645 = vsel %vm503, %v637, 0
      %647 = vmatpush.bf16.msra.mxu0 0
      %648 = vmatpush.bf16.msra.mxu0 0
      %649 = vmatpush.bf16.msra.mxu0 0
      %650 = vmatpush.bf16.msra.mxu0 0
      %651 = vmatpush.bf16.msra.mxu0 0
      %652 = vmatpush.bf16.msra.mxu0 0
      %653 = vmatpush.bf16.msra.mxu0 0
      %654 = vmatpush.bf16.msra.mxu0 %v642
      %655 = vmatmul.bf16.gmra.mxu0 %v645
      %v656 = vpop.f32.mrf.mxu0
      %v657 = vadd.f32 0.0, %v656
      %v658 = vpop.f32.mrf.mxu0
      %v659 = vadd.f32 0.0, %v658
      %660 = vdwg.mxu0
      %v663 = vunpack.c.l.b16 %v233
      %v664 = vunpack.c.l.b16 %v234
      %v665 = vpack.c.b16 %v664, %v663
      %v668 = vunpack.c.l.b16 %v488
      %v669 = vunpack.c.l.b16 %v489
      %v670 = vpack.c.b16 %v669, %v668
      %v673 = vsel %vm503, %v665, 0
      %675 = vmatpush.bf16.msra.mxu0 0
      %676 = vmatpush.bf16.msra.mxu0 0
      %677 = vmatpush.bf16.msra.mxu0 0
      %678 = vmatpush.bf16.msra.mxu0 0
      %679 = vmatpush.bf16.msra.mxu0 0
      %680 = vmatpush.bf16.msra.mxu0 0
      %681 = vmatpush.bf16.msra.mxu0 0
      %682 = vmatpush.bf16.msra.mxu0 %v670
      %683 = vmatmul.bf16.gmra.mxu0 %v673
      %v684 = vpop.f32.mrf.mxu0
      %v685 = vadd.f32 0.0, %v684
      %v686 = vpop.f32.mrf.mxu0
      %v687 = vadd.f32 0.0, %v686
      %688 = vdwg.mxu0
      %v691 = vunpack.c.l.b16 %v235
      %v692 = vunpack.c.l.b16 %v236
      %v693 = vpack.c.b16 %v692, %v691
      %v696 = vunpack.c.l.b16 %v490
      %v697 = vunpack.c.l.b16 %v491
      %v698 = vpack.c.b16 %v697, %v696
      %v701 = vsel %vm503, %v693, 0
      %703 = vmatpush.bf16.msra.mxu0 0
      %704 = vmatpush.bf16.msra.mxu0 0
      %705 = vmatpush.bf16.msra.mxu0 0
      %706 = vmatpush.bf16.msra.mxu0 0
      %707 = vmatpush.bf16.msra.mxu0 0
      %708 = vmatpush.bf16.msra.mxu0 0
      %709 = vmatpush.bf16.msra.mxu0 0
      %710 = vmatpush.bf16.msra.mxu0 %v698
      %711 = vmatmul.bf16.gmra.mxu0 %v701
      %v712 = vpop.f32.mrf.mxu0
      %v713 = vadd.f32 0.0, %v712
      %v714 = vpop.f32.mrf.mxu0
      %v715 = vadd.f32 0.0, %v714
      %716 = vdwg.mxu0
      %v717 = vperm.slane %v237, 0
      %v718 = vadd.f32 %v517, %v717
      %v719 = vadd.f32 %v519, %v717
      %v720 = vadd.f32 %v545, %v717
      %v721 = vadd.f32 %v547, %v717
      %v722 = vadd.f32 %v573, %v717
      %v723 = vadd.f32 %v575, %v717
      %v724 = vadd.f32 %v601, %v717
      %v725 = vadd.f32 %v603, %v717
      %v726 = vadd.f32 %v629, %v717
      %v727 = vadd.f32 %v631, %v717
      %v728 = vadd.f32 %v657, %v717
      %v729 = vadd.f32 %v659, %v717
      %v730 = vadd.f32 %v685, %v717
      %v731 = vadd.f32 %v687, %v717
      %v732 = vadd.f32 %v713, %v717
      %v733 = vadd.f32 %v715, %v717
      %v734 = vmax.f32 %v718, 0.0
      %v735 = vmax.f32 %v719, 0.0
      %v736 = vmax.f32 %v720, 0.0
      %v737 = vmax.f32 %v721, 0.0
      %v738 = vmax.f32 %v722, 0.0
      %v739 = vmax.f32 %v723, 0.0
      %v740 = vmax.f32 %v724, 0.0
      %v741 = vmax.f32 %v725, 0.0
      %v742 = vmax.f32 %v726, 0.0
      %v743 = vmax.f32 %v727, 0.0
      %v744 = vmax.f32 %v728, 0.0
      %v745 = vmax.f32 %v729, 0.0
      %v746 = vmax.f32 %v730, 0.0
      %v747 = vmax.f32 %v731, 0.0
      %v748 = vmax.f32 %v732, 0.0
      %v749 = vmax.f32 %v733, 0.0
      %v750 = vadd.f32 %v734, %v460
      %v751 = vadd.f32 %v735, %v461
      %v752 = vadd.f32 %v736, %v462
      %v753 = vadd.f32 %v737, %v463
      %v754 = vadd.f32 %v738, %v464
      %v755 = vadd.f32 %v739, %v465
      %v756 = vadd.f32 %v740, %v466
      %v757 = vadd.f32 %v741, %v467
      %v758 = vadd.f32 %v742, %v468
      %v759 = vadd.f32 %v743, %v469
      %v760 = vadd.f32 %v744, %v470
      %v761 = vadd.f32 %v745, %v471
      %v762 = vadd.f32 %v746, %v472
      %v763 = vadd.f32 %v747, %v473
      %v764 = vadd.f32 %v748, %v474
      %v765 = vadd.f32 %v749, %v475
      %v766 = vperm.slane %v237, 2
      %v767 = vmul.f32 %v750, %v766
      %v768 = vmul.f32 %v751, %v766
      %v769 = vmul.f32 %v752, %v766
      %v770 = vmul.f32 %v753, %v766
      %v771 = vmul.f32 %v754, %v766
      %v772 = vmul.f32 %v755, %v766
      %v773 = vmul.f32 %v756, %v766
      %v774 = vmul.f32 %v757, %v766
      %v775 = vmul.f32 %v758, %v766
      %v776 = vmul.f32 %v759, %v766
      %v777 = vmul.f32 %v760, %v766
      %v778 = vmul.f32 %v761, %v766
      %v779 = vmul.f32 %v762, %v766
      %v780 = vmul.f32 %v763, %v766
      %v781 = vmul.f32 %v764, %v766
      %v782 = vmul.f32 %v765, %v766
      %v783 = vperm.slane %v237, 3
      %v784 = vadd.f32 %v767, %v783
      %v785 = vadd.f32 %v768, %v783
      %v786 = vadd.f32 %v769, %v783
      %v787 = vadd.f32 %v770, %v783
      %v788 = vadd.f32 %v771, %v783
      %v789 = vadd.f32 %v772, %v783
      %v790 = vadd.f32 %v773, %v783
      %v791 = vadd.f32 %v774, %v783
      %v792 = vadd.f32 %v775, %v783
      %v793 = vadd.f32 %v776, %v783
      %v794 = vadd.f32 %v777, %v783
      %v795 = vadd.f32 %v778, %v783
      %v796 = vadd.f32 %v779, %v783
      %v797 = vadd.f32 %v780, %v783
      %v798 = vadd.f32 %v781, %v783
      %v799 = vadd.f32 %v782, %v783
      %v800 = vpack.c.bf16 %v785, %v784
      %v801 = vpack.c.bf16 %v787, %v786
      %v802 = vpack.c.bf16 %v789, %v788
      %v803 = vpack.c.bf16 %v791, %v790
      %v804 = vpack.c.bf16 %v793, %v792
      %v805 = vpack.c.bf16 %v795, %v794
      %v806 = vpack.c.bf16 %v797, %v796
      %v807 = vpack.c.bf16 %v799, %v798
      %v808 = vld [vmem:[%s2 + $0x20] sm:$0xff]
      %v809 = vld [vmem:[%s2 + $0x28] sm:$0xff]
      %v810 = vld [vmem:[%s2 + $0x30] sm:$0xff]
      %v811 = vld [vmem:[%s2 + $0x38] sm:$0xff]
      %v812 = vld [vmem:[%s2 + $0x40] sm:$0xff]
      %v813 = vld [vmem:[%s2 + $0x48] sm:$0xff]
      %v814 = vld [vmem:[%s2 + $0x50] sm:$0xff]
      %v815 = vld [vmem:[%s2 + $0x58] sm:$0xff]
      %v816 = vld [vmem:[%s2 + $0x60] sm:$0xff]
      %v817 = vld [vmem:[%s2 + $0x68] sm:$0xff]
      %v818 = vld [vmem:[%s2 + $0x70] sm:$0xff]
      %v819 = vld [vmem:[%s2 + $0x78] sm:$0xff]
      %v820 = vld [vmem:[%s2 + $0x80] sm:$0xff]
      %v821 = vld [vmem:[%s2 + $0x88] sm:$0xff]
      %v822 = vld [vmem:[%s2 + $0x90] sm:$0xff]
      %v823 = vld [vmem:[%s2 + $0x98] sm:$0xff]
      %v840 = vunpack.c.l.b16 %v808
      %v841 = vunpack.c.h.b16 %v808
      %v842 = vunpack.c.l.b16 %v809
      %v843 = vunpack.c.h.b16 %v809
      %v844 = vunpack.c.l.b16 %v810
      %v845 = vunpack.c.h.b16 %v810
      %v846 = vunpack.c.l.b16 %v811
      %v847 = vunpack.c.h.b16 %v811
      %v848 = vunpack.c.l.b16 %v812
      %v849 = vunpack.c.h.b16 %v812
      %v850 = vunpack.c.l.b16 %v813
      %v851 = vunpack.c.h.b16 %v813
      %v852 = vunpack.c.l.b16 %v814
      %v853 = vunpack.c.h.b16 %v814
      %v854 = vunpack.c.l.b16 %v815
      %v855 = vunpack.c.h.b16 %v815
      %v856 = vunpack.c.l.b16 %v816
      %v857 = vunpack.c.h.b16 %v816
      %v858 = vunpack.c.l.b16 %v817
      %v859 = vunpack.c.h.b16 %v817
      %v860 = vunpack.c.l.b16 %v818
      %v861 = vunpack.c.h.b16 %v818
      %v862 = vunpack.c.l.b16 %v819
      %v863 = vunpack.c.h.b16 %v819
      %v864 = vunpack.c.l.b16 %v820
      %v865 = vunpack.c.h.b16 %v820
      %v866 = vunpack.c.l.b16 %v821
      %v867 = vunpack.c.h.b16 %v821
      %v868 = vunpack.c.l.b16 %v822
      %v869 = vunpack.c.h.b16 %v822
      %v870 = vunpack.c.l.b16 %v823
      %v871 = vunpack.c.h.b16 %v823
      %v872 = vpack.c.b16 %v842, %v840
      %v873 = vpack.c.b16 %v843, %v841
      %v874 = vpack.c.b16 %v846, %v844
      %v875 = vpack.c.b16 %v847, %v845
      %v876 = vpack.c.b16 %v850, %v848
      %v877 = vpack.c.b16 %v851, %v849
      %v878 = vpack.c.b16 %v854, %v852
      %v879 = vpack.c.b16 %v855, %v853
      %v880 = vpack.c.b16 %v858, %v856
      %v881 = vpack.c.b16 %v859, %v857
      %v882 = vpack.c.b16 %v862, %v860
      %v883 = vpack.c.b16 %v863, %v861
      %v884 = vpack.c.b16 %v866, %v864
      %v885 = vpack.c.b16 %v867, %v865
      %v886 = vpack.c.b16 %v870, %v868
      %v887 = vpack.c.b16 %v871, %v869
      %904 = vmatpush.bf16.msra.mxu0 %v886
      %905 = vmatpush.bf16.msra.mxu0 %v884
      %906 = vmatpush.bf16.msra.mxu0 %v882
      %907 = vmatpush.bf16.msra.mxu0 %v880
      %908 = vmatpush.bf16.msra.mxu0 %v878
      %909 = vmatpush.bf16.msra.mxu0 %v876
      %910 = vmatpush.bf16.msra.mxu0 %v874
      %911 = vmatpush.bf16.msra.mxu0 %v872
      %912 = vmatmul.bf16.gmra.mxu0 %v800
      %v913 = vpop.f32.mrf.mxu0
      %v914 = vadd.f32 0.0, %v913
      %v915 = vpop.f32.mrf.mxu0
      %v916 = vadd.f32 0.0, %v915
      %917 = vmatmul.bf16.gmra.mxu0 %v801
      %v918 = vpop.f32.mrf.mxu0
      %v919 = vadd.f32 0.0, %v918
      %v920 = vpop.f32.mrf.mxu0
      %v921 = vadd.f32 0.0, %v920
      %922 = vmatmul.bf16.gmra.mxu0 %v802
      %v923 = vpop.f32.mrf.mxu0
      %v924 = vadd.f32 0.0, %v923
      %v925 = vpop.f32.mrf.mxu0
      %v926 = vadd.f32 0.0, %v925
      %927 = vmatmul.bf16.gmra.mxu0 %v803
      %v928 = vpop.f32.mrf.mxu0
      %v929 = vadd.f32 0.0, %v928
      %v930 = vpop.f32.mrf.mxu0
      %v931 = vadd.f32 0.0, %v930
      %932 = vmatmul.bf16.gmra.mxu0 %v804
      %v933 = vpop.f32.mrf.mxu0
      %v934 = vadd.f32 0.0, %v933
      %v935 = vpop.f32.mrf.mxu0
      %v936 = vadd.f32 0.0, %v935
      %937 = vmatmul.bf16.gmra.mxu0 %v805
      %v938 = vpop.f32.mrf.mxu0
      %v939 = vadd.f32 0.0, %v938
      %v940 = vpop.f32.mrf.mxu0
      %v941 = vadd.f32 0.0, %v940
      %942 = vmatmul.bf16.gmra.mxu0 %v806
      %v943 = vpop.f32.mrf.mxu0
      %v944 = vadd.f32 0.0, %v943
      %v945 = vpop.f32.mrf.mxu0
      %v946 = vadd.f32 0.0, %v945
      %947 = vmatmul.bf16.gmra.mxu0 %v807
      %v948 = vpop.f32.mrf.mxu0
      %v949 = vadd.f32 0.0, %v948
      %v950 = vpop.f32.mrf.mxu0
      %v951 = vadd.f32 0.0, %v950
      %952 = vdwg.mxu0
      %953 = vmatpush.bf16.msra.mxu0 %v887
      %954 = vmatpush.bf16.msra.mxu0 %v885
      %955 = vmatpush.bf16.msra.mxu0 %v883
      %956 = vmatpush.bf16.msra.mxu0 %v881
      %957 = vmatpush.bf16.msra.mxu0 %v879
      %958 = vmatpush.bf16.msra.mxu0 %v877
      %959 = vmatpush.bf16.msra.mxu0 %v875
      %960 = vmatpush.bf16.msra.mxu0 %v873
      %961 = vmatmul.bf16.gmra.mxu0 %v800
      %v962 = vpop.f32.mrf.mxu0
      %v963 = vadd.f32 0.0, %v962
      %v964 = vpop.f32.mrf.mxu0
      %v965 = vadd.f32 0.0, %v964
      %966 = vmatmul.bf16.gmra.mxu0 %v801
      %v967 = vpop.f32.mrf.mxu0
      %v968 = vadd.f32 0.0, %v967
      %v969 = vpop.f32.mrf.mxu0
      %v970 = vadd.f32 0.0, %v969
      %971 = vmatmul.bf16.gmra.mxu0 %v802
      %v972 = vpop.f32.mrf.mxu0
      %v973 = vadd.f32 0.0, %v972
      %v974 = vpop.f32.mrf.mxu0
      %v975 = vadd.f32 0.0, %v974
      %976 = vmatmul.bf16.gmra.mxu0 %v803
      %v977 = vpop.f32.mrf.mxu0
      %v978 = vadd.f32 0.0, %v977
      %v979 = vpop.f32.mrf.mxu0
      %v980 = vadd.f32 0.0, %v979
      %981 = vmatmul.bf16.gmra.mxu0 %v804
      %v982 = vpop.f32.mrf.mxu0
      %v983 = vadd.f32 0.0, %v982
      %v984 = vpop.f32.mrf.mxu0
      %v985 = vadd.f32 0.0, %v984
      %986 = vmatmul.bf16.gmra.mxu0 %v805
      %v987 = vpop.f32.mrf.mxu0
      %v988 = vadd.f32 0.0, %v987
      %v989 = vpop.f32.mrf.mxu0
      %v990 = vadd.f32 0.0, %v989
      %991 = vmatmul.bf16.gmra.mxu0 %v806
      %v992 = vpop.f32.mrf.mxu0
      %v993 = vadd.f32 0.0, %v992
      %v994 = vpop.f32.mrf.mxu0
      %v995 = vadd.f32 0.0, %v994
      %996 = vmatmul.bf16.gmra.mxu0 %v807
      %v997 = vpop.f32.mrf.mxu0
      %v998 = vadd.f32 0.0, %v997
      %v999 = vpop.f32.mrf.mxu0
      %v1000 = vadd.f32 0.0, %v999
      %1001 = vdwg.mxu0
      %v1002 = vperm.slane %v237, 5
      %v1003 = vadd.f32 %v963, %v1002
      %v1004 = vadd.f32 %v965, %v1002
      %v1005 = vadd.f32 %v968, %v1002
      %v1006 = vadd.f32 %v970, %v1002
      %v1007 = vadd.f32 %v973, %v1002
      %v1008 = vadd.f32 %v975, %v1002
      %v1009 = vadd.f32 %v978, %v1002
      %v1010 = vadd.f32 %v980, %v1002
      %v1011 = vadd.f32 %v983, %v1002
      %v1012 = vadd.f32 %v985, %v1002
      %v1013 = vadd.f32 %v988, %v1002
      %v1014 = vadd.f32 %v990, %v1002
      %v1015 = vadd.f32 %v993, %v1002
      %v1016 = vadd.f32 %v995, %v1002
      %v1017 = vadd.f32 %v998, %v1002
      %v1018 = vadd.f32 %v1000, %v1002
      %v1019 = vmax.f32 %v1003, 0.0
      %v1020 = vmax.f32 %v1004, 0.0
      %v1021 = vmax.f32 %v1005, 0.0
      %v1022 = vmax.f32 %v1006, 0.0
      %v1023 = vmax.f32 %v1007, 0.0
      %v1024 = vmax.f32 %v1008, 0.0
      %v1025 = vmax.f32 %v1009, 0.0
      %v1026 = vmax.f32 %v1010, 0.0
      %v1027 = vmax.f32 %v1011, 0.0
      %v1028 = vmax.f32 %v1012, 0.0
      %v1029 = vmax.f32 %v1013, 0.0
      %v1030 = vmax.f32 %v1014, 0.0
      %v1031 = vmax.f32 %v1015, 0.0
      %v1032 = vmax.f32 %v1016, 0.0
      %v1033 = vmax.f32 %v1017, 0.0
      %v1034 = vmax.f32 %v1018, 0.0
      %v1035 = vpack.c.bf16 %v914, %v914
      %v1036 = vpack.c.bf16 %v916, %v916
      %v1037 = vpack.c.bf16 %v919, %v919
      %v1038 = vpack.c.bf16 %v921, %v921
      %v1039 = vpack.c.bf16 %v924, %v924
      %v1040 = vpack.c.bf16 %v926, %v926
      %v1041 = vpack.c.bf16 %v929, %v929
      %v1042 = vpack.c.bf16 %v931, %v931
      %v1043 = vpack.c.bf16 %v934, %v934
      %v1044 = vpack.c.bf16 %v936, %v936
      %v1045 = vpack.c.bf16 %v939, %v939
      %v1046 = vpack.c.bf16 %v941, %v941
      %v1047 = vpack.c.bf16 %v944, %v944
      %v1048 = vpack.c.bf16 %v946, %v946
      %v1049 = vpack.c.bf16 %v949, %v949
      %v1050 = vpack.c.bf16 %v951, %v951
      %v1053 = vunpack.c.l.b16 %v1035
      %v1054 = vunpack.c.l.b16 %v1036
      %v1055 = vpack.c.b16 %v1054, %v1053
      %1057 = vmatpush.bf16.msra.mxu0 0
      %1058 = vmatpush.bf16.msra.mxu0 0
      %1059 = vmatpush.bf16.msra.mxu0 0
      %1060 = vmatpush.bf16.msra.mxu0 0
      %1061 = vmatpush.bf16.msra.mxu0 0
      %1062 = vmatpush.bf16.msra.mxu0 0
      %1063 = vmatpush.bf16.msra.mxu0 0
      %1064 = vmatpush.bf16.msra.mxu0 %v1055
      %1065 = vmatmul.bf16.gmra.mxu0 %v505
      %v1066 = vpop.f32.mrf.mxu0
      %v1067 = vadd.f32 0.0, %v1066
      %v1068 = vpop.f32.mrf.mxu0
      %v1069 = vadd.f32 0.0, %v1068
      %1070 = vdwg.mxu0
      %v1073 = vunpack.c.l.b16 %v1037
      %v1074 = vunpack.c.l.b16 %v1038
      %v1075 = vpack.c.b16 %v1074, %v1073
      %1077 = vmatpush.bf16.msra.mxu0 0
      %1078 = vmatpush.bf16.msra.mxu0 0
      %1079 = vmatpush.bf16.msra.mxu0 0
      %1080 = vmatpush.bf16.msra.mxu0 0
      %1081 = vmatpush.bf16.msra.mxu0 0
      %1082 = vmatpush.bf16.msra.mxu0 0
      %1083 = vmatpush.bf16.msra.mxu0 0
      %1084 = vmatpush.bf16.msra.mxu0 %v1075
      %1085 = vmatmul.bf16.gmra.mxu0 %v533
      %v1086 = vpop.f32.mrf.mxu0
      %v1087 = vadd.f32 0.0, %v1086
      %v1088 = vpop.f32.mrf.mxu0
      %v1089 = vadd.f32 0.0, %v1088
      %1090 = vdwg.mxu0
      %v1093 = vunpack.c.l.b16 %v1039
      %v1094 = vunpack.c.l.b16 %v1040
      %v1095 = vpack.c.b16 %v1094, %v1093
      %1097 = vmatpush.bf16.msra.mxu0 0
      %1098 = vmatpush.bf16.msra.mxu0 0
      %1099 = vmatpush.bf16.msra.mxu0 0
      %1100 = vmatpush.bf16.msra.mxu0 0
      %1101 = vmatpush.bf16.msra.mxu0 0
      %1102 = vmatpush.bf16.msra.mxu0 0
      %1103 = vmatpush.bf16.msra.mxu0 0
      %1104 = vmatpush.bf16.msra.mxu0 %v1095
      %1105 = vmatmul.bf16.gmra.mxu0 %v561
      %v1106 = vpop.f32.mrf.mxu0
      %v1107 = vadd.f32 0.0, %v1106
      %v1108 = vpop.f32.mrf.mxu0
      %v1109 = vadd.f32 0.0, %v1108
      %1110 = vdwg.mxu0
      %v1113 = vunpack.c.l.b16 %v1041
      %v1114 = vunpack.c.l.b16 %v1042
      %v1115 = vpack.c.b16 %v1114, %v1113
      %1117 = vmatpush.bf16.msra.mxu0 0
      %1118 = vmatpush.bf16.msra.mxu0 0
      %1119 = vmatpush.bf16.msra.mxu0 0
      %1120 = vmatpush.bf16.msra.mxu0 0
      %1121 = vmatpush.bf16.msra.mxu0 0
      %1122 = vmatpush.bf16.msra.mxu0 0
      %1123 = vmatpush.bf16.msra.mxu0 0
      %1124 = vmatpush.bf16.msra.mxu0 %v1115
      %1125 = vmatmul.bf16.gmra.mxu0 %v589
      %v1126 = vpop.f32.mrf.mxu0
      %v1127 = vadd.f32 0.0, %v1126
      %v1128 = vpop.f32.mrf.mxu0
      %v1129 = vadd.f32 0.0, %v1128
      %1130 = vdwg.mxu0
      %v1133 = vunpack.c.l.b16 %v1043
      %v1134 = vunpack.c.l.b16 %v1044
      %v1135 = vpack.c.b16 %v1134, %v1133
      %1137 = vmatpush.bf16.msra.mxu0 0
      %1138 = vmatpush.bf16.msra.mxu0 0
      %1139 = vmatpush.bf16.msra.mxu0 0
      %1140 = vmatpush.bf16.msra.mxu0 0
      %1141 = vmatpush.bf16.msra.mxu0 0
      %1142 = vmatpush.bf16.msra.mxu0 0
      %1143 = vmatpush.bf16.msra.mxu0 0
      %1144 = vmatpush.bf16.msra.mxu0 %v1135
      %1145 = vmatmul.bf16.gmra.mxu0 %v617
      %v1146 = vpop.f32.mrf.mxu0
      %v1147 = vadd.f32 0.0, %v1146
      %v1148 = vpop.f32.mrf.mxu0
      %v1149 = vadd.f32 0.0, %v1148
      %1150 = vdwg.mxu0
      %v1153 = vunpack.c.l.b16 %v1045
      %v1154 = vunpack.c.l.b16 %v1046
      %v1155 = vpack.c.b16 %v1154, %v1153
      %1157 = vmatpush.bf16.msra.mxu0 0
      %1158 = vmatpush.bf16.msra.mxu0 0
      %1159 = vmatpush.bf16.msra.mxu0 0
      %1160 = vmatpush.bf16.msra.mxu0 0
      %1161 = vmatpush.bf16.msra.mxu0 0
      %1162 = vmatpush.bf16.msra.mxu0 0
      %1163 = vmatpush.bf16.msra.mxu0 0
      %1164 = vmatpush.bf16.msra.mxu0 %v1155
      %1165 = vmatmul.bf16.gmra.mxu0 %v645
      %v1166 = vpop.f32.mrf.mxu0
      %v1167 = vadd.f32 0.0, %v1166
      %v1168 = vpop.f32.mrf.mxu0
      %v1169 = vadd.f32 0.0, %v1168
      %1170 = vdwg.mxu0
      %v1173 = vunpack.c.l.b16 %v1047
      %v1174 = vunpack.c.l.b16 %v1048
      %v1175 = vpack.c.b16 %v1174, %v1173
      %1177 = vmatpush.bf16.msra.mxu0 0
      %1178 = vmatpush.bf16.msra.mxu0 0
      %1179 = vmatpush.bf16.msra.mxu0 0
      %1180 = vmatpush.bf16.msra.mxu0 0
      %1181 = vmatpush.bf16.msra.mxu0 0
      %1182 = vmatpush.bf16.msra.mxu0 0
      %1183 = vmatpush.bf16.msra.mxu0 0
      %1184 = vmatpush.bf16.msra.mxu0 %v1175
      %1185 = vmatmul.bf16.gmra.mxu0 %v673
      %v1186 = vpop.f32.mrf.mxu0
      %v1187 = vadd.f32 0.0, %v1186
      %v1188 = vpop.f32.mrf.mxu0
      %v1189 = vadd.f32 0.0, %v1188
      %1190 = vdwg.mxu0
      %v1193 = vunpack.c.l.b16 %v1049
      %v1194 = vunpack.c.l.b16 %v1050
      %v1195 = vpack.c.b16 %v1194, %v1193
      %1197 = vmatpush.bf16.msra.mxu0 0
      %1198 = vmatpush.bf16.msra.mxu0 0
      %1199 = vmatpush.bf16.msra.mxu0 0
      %1200 = vmatpush.bf16.msra.mxu0 0
      %1201 = vmatpush.bf16.msra.mxu0 0
      %1202 = vmatpush.bf16.msra.mxu0 0
      %1203 = vmatpush.bf16.msra.mxu0 0
      %1204 = vmatpush.bf16.msra.mxu0 %v1195
      %1205 = vmatmul.bf16.gmra.mxu0 %v701
      %v1206 = vpop.f32.mrf.mxu0
      %v1207 = vadd.f32 0.0, %v1206
      %v1208 = vpop.f32.mrf.mxu0
      %v1209 = vadd.f32 0.0, %v1208
      %1210 = vdwg.mxu0
      %v1211 = vperm.slane %v237, 4
      %v1212 = vadd.f32 %v1067, %v1211
      %v1213 = vadd.f32 %v1069, %v1211
      %v1214 = vadd.f32 %v1087, %v1211
      %v1215 = vadd.f32 %v1089, %v1211
      %v1216 = vadd.f32 %v1107, %v1211
      %v1217 = vadd.f32 %v1109, %v1211
      %v1218 = vadd.f32 %v1127, %v1211
      %v1219 = vadd.f32 %v1129, %v1211
      %v1220 = vadd.f32 %v1147, %v1211
      %v1221 = vadd.f32 %v1149, %v1211
      %v1222 = vadd.f32 %v1167, %v1211
      %v1223 = vadd.f32 %v1169, %v1211
      %v1224 = vadd.f32 %v1187, %v1211
      %v1225 = vadd.f32 %v1189, %v1211
      %v1226 = vadd.f32 %v1207, %v1211
      %v1227 = vadd.f32 %v1209, %v1211
      %v1228 = vmax.f32 %v1212, 0.0
      %v1229 = vmax.f32 %v1213, 0.0
      %v1230 = vmax.f32 %v1214, 0.0
      %v1231 = vmax.f32 %v1215, 0.0
      %v1232 = vmax.f32 %v1216, 0.0
      %v1233 = vmax.f32 %v1217, 0.0
      %v1234 = vmax.f32 %v1218, 0.0
      %v1235 = vmax.f32 %v1219, 0.0
      %v1236 = vmax.f32 %v1220, 0.0
      %v1237 = vmax.f32 %v1221, 0.0
      %v1238 = vmax.f32 %v1222, 0.0
      %v1239 = vmax.f32 %v1223, 0.0
      %v1240 = vmax.f32 %v1224, 0.0
      %v1241 = vmax.f32 %v1225, 0.0
      %v1242 = vmax.f32 %v1226, 0.0
      %v1243 = vmax.f32 %v1227, 0.0
      %v1244 = vadd.f32 %v1228, %v1019
      %v1245 = vadd.f32 %v1229, %v1020
      %v1246 = vadd.f32 %v1230, %v1021
      %v1247 = vadd.f32 %v1231, %v1022
      %v1248 = vadd.f32 %v1232, %v1023
      %v1249 = vadd.f32 %v1233, %v1024
      %v1250 = vadd.f32 %v1234, %v1025
      %v1251 = vadd.f32 %v1235, %v1026
      %v1252 = vadd.f32 %v1236, %v1027
      %v1253 = vadd.f32 %v1237, %v1028
      %v1254 = vadd.f32 %v1238, %v1029
      %v1255 = vadd.f32 %v1239, %v1030
      %v1256 = vadd.f32 %v1240, %v1031
      %v1257 = vadd.f32 %v1241, %v1032
      %v1258 = vadd.f32 %v1242, %v1033
      %v1259 = vadd.f32 %v1243, %v1034
      %v1260 = vperm.slane %v237, 6
      %v1261 = vmul.f32 %v1244, %v1260
      %v1262 = vmul.f32 %v1245, %v1260
      %v1263 = vmul.f32 %v1246, %v1260
      %v1264 = vmul.f32 %v1247, %v1260
      %v1265 = vmul.f32 %v1248, %v1260
      %v1266 = vmul.f32 %v1249, %v1260
      %v1267 = vmul.f32 %v1250, %v1260
      %v1268 = vmul.f32 %v1251, %v1260
      %v1269 = vmul.f32 %v1252, %v1260
      %v1270 = vmul.f32 %v1253, %v1260
      %v1271 = vmul.f32 %v1254, %v1260
      %v1272 = vmul.f32 %v1255, %v1260
      %v1273 = vmul.f32 %v1256, %v1260
      %v1274 = vmul.f32 %v1257, %v1260
      %v1275 = vmul.f32 %v1258, %v1260
      %v1276 = vmul.f32 %v1259, %v1260
      %v1277 = vperm.slane %v237, 7
      %v1278 = vadd.f32 %v1261, %v1277
      %v1279 = vadd.f32 %v1262, %v1277
      %v1280 = vadd.f32 %v1263, %v1277
      %v1281 = vadd.f32 %v1264, %v1277
      %v1282 = vadd.f32 %v1265, %v1277
      %v1283 = vadd.f32 %v1266, %v1277
      %v1284 = vadd.f32 %v1267, %v1277
      %v1285 = vadd.f32 %v1268, %v1277
      %v1286 = vadd.f32 %v1269, %v1277
      %v1287 = vadd.f32 %v1270, %v1277
      %v1288 = vadd.f32 %v1271, %v1277
      %v1289 = vadd.f32 %v1272, %v1277
      %v1290 = vadd.f32 %v1273, %v1277
      %v1291 = vadd.f32 %v1274, %v1277
      %v1292 = vadd.f32 %v1275, %v1277
      %v1293 = vadd.f32 %v1276, %v1277
      %v1294 = vpack.c.bf16 %v1279, %v1278
      %v1295 = vpack.c.bf16 %v1281, %v1280
      %v1296 = vpack.c.bf16 %v1283, %v1282
      %v1297 = vpack.c.bf16 %v1285, %v1284
      %v1298 = vpack.c.bf16 %v1287, %v1286
      %v1299 = vpack.c.bf16 %v1289, %v1288
      %v1300 = vpack.c.bf16 %v1291, %v1290
      %v1301 = vpack.c.bf16 %v1293, %v1292
      %v1302 = vld [vmem:[%s2 + $0xa0] sm:$0xff]
      %v1303 = vld [vmem:[%s2 + $0xa8] sm:$0xff]
      %v1304 = vld [vmem:[%s2 + $0xb0] sm:$0xff]
      %v1305 = vld [vmem:[%s2 + $0xb8] sm:$0xff]
      %v1306 = vld [vmem:[%s2 + $0xc0] sm:$0xff]
      %v1307 = vld [vmem:[%s2 + $0xc8] sm:$0xff]
      %v1308 = vld [vmem:[%s2 + $0xd0] sm:$0xff]
      %v1309 = vld [vmem:[%s2 + $0xd8] sm:$0xff]
      %v1310 = vld [vmem:[%s2 + $0xe0] sm:$0xff]
      %v1311 = vld [vmem:[%s2 + $0xe8] sm:$0xff]
      %v1312 = vld [vmem:[%s2 + $0xf0] sm:$0xff]
      %v1313 = vld [vmem:[%s2 + $0xf8] sm:$0xff]
      %v1314 = vld [vmem:[%s2 + $0x100] sm:$0xff]
      %v1315 = vld [vmem:[%s2 + $0x108] sm:$0xff]
      %v1316 = vld [vmem:[%s2 + $0x110] sm:$0xff]
      %v1317 = vld [vmem:[%s2 + $0x118] sm:$0xff]
      %v1334 = vunpack.c.l.b16 %v1302
      %v1335 = vunpack.c.h.b16 %v1302
      %v1336 = vunpack.c.l.b16 %v1303
      %v1337 = vunpack.c.h.b16 %v1303
      %v1338 = vunpack.c.l.b16 %v1304
      %v1339 = vunpack.c.h.b16 %v1304
      %v1340 = vunpack.c.l.b16 %v1305
      %v1341 = vunpack.c.h.b16 %v1305
      %v1342 = vunpack.c.l.b16 %v1306
      %v1343 = vunpack.c.h.b16 %v1306
      %v1344 = vunpack.c.l.b16 %v1307
      %v1345 = vunpack.c.h.b16 %v1307
      %v1346 = vunpack.c.l.b16 %v1308
      %v1347 = vunpack.c.h.b16 %v1308
      %v1348 = vunpack.c.l.b16 %v1309
      %v1349 = vunpack.c.h.b16 %v1309
      %v1350 = vunpack.c.l.b16 %v1310
      %v1351 = vunpack.c.h.b16 %v1310
      %v1352 = vunpack.c.l.b16 %v1311
      %v1353 = vunpack.c.h.b16 %v1311
      %v1354 = vunpack.c.l.b16 %v1312
      %v1355 = vunpack.c.h.b16 %v1312
      %v1356 = vunpack.c.l.b16 %v1313
      %v1357 = vunpack.c.h.b16 %v1313
      %v1358 = vunpack.c.l.b16 %v1314
      %v1359 = vunpack.c.h.b16 %v1314
      %v1360 = vunpack.c.l.b16 %v1315
      %v1361 = vunpack.c.h.b16 %v1315
      %v1362 = vunpack.c.l.b16 %v1316
      %v1363 = vunpack.c.h.b16 %v1316
      %v1364 = vunpack.c.l.b16 %v1317
      %v1365 = vunpack.c.h.b16 %v1317
      %v1366 = vpack.c.b16 %v1336, %v1334
      %v1367 = vpack.c.b16 %v1337, %v1335
      %v1368 = vpack.c.b16 %v1340, %v1338
      %v1369 = vpack.c.b16 %v1341, %v1339
      %v1370 = vpack.c.b16 %v1344, %v1342
      %v1371 = vpack.c.b16 %v1345, %v1343
      %v1372 = vpack.c.b16 %v1348, %v1346
      %v1373 = vpack.c.b16 %v1349, %v1347
      %v1374 = vpack.c.b16 %v1352, %v1350
      %v1375 = vpack.c.b16 %v1353, %v1351
      %v1376 = vpack.c.b16 %v1356, %v1354
      %v1377 = vpack.c.b16 %v1357, %v1355
      %v1378 = vpack.c.b16 %v1360, %v1358
      %v1379 = vpack.c.b16 %v1361, %v1359
      %v1380 = vpack.c.b16 %v1364, %v1362
      %v1381 = vpack.c.b16 %v1365, %v1363
      %1398 = vmatpush.bf16.msra.mxu0 %v1380
      %1399 = vmatpush.bf16.msra.mxu0 %v1378
      %1400 = vmatpush.bf16.msra.mxu0 %v1376
      %1401 = vmatpush.bf16.msra.mxu0 %v1374
      %1402 = vmatpush.bf16.msra.mxu0 %v1372
      %1403 = vmatpush.bf16.msra.mxu0 %v1370
      %1404 = vmatpush.bf16.msra.mxu0 %v1368
      %1405 = vmatpush.bf16.msra.mxu0 %v1366
      %1406 = vmatmul.bf16.gmra.mxu0 %v1294
      %v1407 = vpop.f32.mrf.mxu0
      %v1408 = vadd.f32 0.0, %v1407
      %v1409 = vpop.f32.mrf.mxu0
      %v1410 = vadd.f32 0.0, %v1409
      %1411 = vmatmul.bf16.gmra.mxu0 %v1295
      %v1412 = vpop.f32.mrf.mxu0
      %v1413 = vadd.f32 0.0, %v1412
      %v1414 = vpop.f32.mrf.mxu0
      %v1415 = vadd.f32 0.0, %v1414
      %1416 = vmatmul.bf16.gmra.mxu0 %v1296
      %v1417 = vpop.f32.mrf.mxu0
      %v1418 = vadd.f32 0.0, %v1417
      %v1419 = vpop.f32.mrf.mxu0
      %v1420 = vadd.f32 0.0, %v1419
      %1421 = vmatmul.bf16.gmra.mxu0 %v1297
      %v1422 = vpop.f32.mrf.mxu0
      %v1423 = vadd.f32 0.0, %v1422
      %v1424 = vpop.f32.mrf.mxu0
      %v1425 = vadd.f32 0.0, %v1424
      %1426 = vmatmul.bf16.gmra.mxu0 %v1298
      %v1427 = vpop.f32.mrf.mxu0
      %v1428 = vadd.f32 0.0, %v1427
      %v1429 = vpop.f32.mrf.mxu0
      %v1430 = vadd.f32 0.0, %v1429
      %1431 = vmatmul.bf16.gmra.mxu0 %v1299
      %v1432 = vpop.f32.mrf.mxu0
      %v1433 = vadd.f32 0.0, %v1432
      %v1434 = vpop.f32.mrf.mxu0
      %v1435 = vadd.f32 0.0, %v1434
      %1436 = vmatmul.bf16.gmra.mxu0 %v1300
      %v1437 = vpop.f32.mrf.mxu0
      %v1438 = vadd.f32 0.0, %v1437
      %v1439 = vpop.f32.mrf.mxu0
      %v1440 = vadd.f32 0.0, %v1439
      %1441 = vmatmul.bf16.gmra.mxu0 %v1301
      %v1442 = vpop.f32.mrf.mxu0
      %v1443 = vadd.f32 0.0, %v1442
      %v1444 = vpop.f32.mrf.mxu0
      %v1445 = vadd.f32 0.0, %v1444
      %1446 = vdwg.mxu0
      %1447 = vmatpush.bf16.msra.mxu0 %v1381
      %1448 = vmatpush.bf16.msra.mxu0 %v1379
      %1449 = vmatpush.bf16.msra.mxu0 %v1377
      %1450 = vmatpush.bf16.msra.mxu0 %v1375
      %1451 = vmatpush.bf16.msra.mxu0 %v1373
      %1452 = vmatpush.bf16.msra.mxu0 %v1371
      %1453 = vmatpush.bf16.msra.mxu0 %v1369
      %1454 = vmatpush.bf16.msra.mxu0 %v1367
      %1455 = vmatmul.bf16.gmra.mxu0 %v1294
      %v1456 = vpop.f32.mrf.mxu0
      %v1457 = vadd.f32 0.0, %v1456
      %v1458 = vpop.f32.mrf.mxu0
      %v1459 = vadd.f32 0.0, %v1458
      %1460 = vmatmul.bf16.gmra.mxu0 %v1295
      %v1461 = vpop.f32.mrf.mxu0
      %v1462 = vadd.f32 0.0, %v1461
      %v1463 = vpop.f32.mrf.mxu0
      %v1464 = vadd.f32 0.0, %v1463
      %1465 = vmatmul.bf16.gmra.mxu0 %v1296
      %v1466 = vpop.f32.mrf.mxu0
      %v1467 = vadd.f32 0.0, %v1466
      %v1468 = vpop.f32.mrf.mxu0
      %v1469 = vadd.f32 0.0, %v1468
      %1470 = vmatmul.bf16.gmra.mxu0 %v1297
      %v1471 = vpop.f32.mrf.mxu0
      %v1472 = vadd.f32 0.0, %v1471
      %v1473 = vpop.f32.mrf.mxu0
      %v1474 = vadd.f32 0.0, %v1473
      %1475 = vmatmul.bf16.gmra.mxu0 %v1298
      %v1476 = vpop.f32.mrf.mxu0
      %v1477 = vadd.f32 0.0, %v1476
      %v1478 = vpop.f32.mrf.mxu0
      %v1479 = vadd.f32 0.0, %v1478
      %1480 = vmatmul.bf16.gmra.mxu0 %v1299
      %v1481 = vpop.f32.mrf.mxu0
      %v1482 = vadd.f32 0.0, %v1481
      %v1483 = vpop.f32.mrf.mxu0
      %v1484 = vadd.f32 0.0, %v1483
      %1485 = vmatmul.bf16.gmra.mxu0 %v1300
      %v1486 = vpop.f32.mrf.mxu0
      %v1487 = vadd.f32 0.0, %v1486
      %v1488 = vpop.f32.mrf.mxu0
      %v1489 = vadd.f32 0.0, %v1488
      %1490 = vmatmul.bf16.gmra.mxu0 %v1301
      %v1491 = vpop.f32.mrf.mxu0
      %v1492 = vadd.f32 0.0, %v1491
      %v1493 = vpop.f32.mrf.mxu0
      %v1494 = vadd.f32 0.0, %v1493
      %1495 = vdwg.mxu0
      %v1496 = vperm.slane %v238, 1
      %v1497 = vadd.f32 %v1457, %v1496
      %v1498 = vadd.f32 %v1459, %v1496
      %v1499 = vadd.f32 %v1462, %v1496
      %v1500 = vadd.f32 %v1464, %v1496
      %v1501 = vadd.f32 %v1467, %v1496
      %v1502 = vadd.f32 %v1469, %v1496
      %v1503 = vadd.f32 %v1472, %v1496
      %v1504 = vadd.f32 %v1474, %v1496
      %v1505 = vadd.f32 %v1477, %v1496
      %v1506 = vadd.f32 %v1479, %v1496
      %v1507 = vadd.f32 %v1482, %v1496
      %v1508 = vadd.f32 %v1484, %v1496
      %v1509 = vadd.f32 %v1487, %v1496
      %v1510 = vadd.f32 %v1489, %v1496
      %v1511 = vadd.f32 %v1492, %v1496
      %v1512 = vadd.f32 %v1494, %v1496
      %v1513 = vmax.f32 %v1497, 0.0
      %v1514 = vmax.f32 %v1498, 0.0
      %v1515 = vmax.f32 %v1499, 0.0
      %v1516 = vmax.f32 %v1500, 0.0
      %v1517 = vmax.f32 %v1501, 0.0
      %v1518 = vmax.f32 %v1502, 0.0
      %v1519 = vmax.f32 %v1503, 0.0
      %v1520 = vmax.f32 %v1504, 0.0
      %v1521 = vmax.f32 %v1505, 0.0
      %v1522 = vmax.f32 %v1506, 0.0
      %v1523 = vmax.f32 %v1507, 0.0
      %v1524 = vmax.f32 %v1508, 0.0
      %v1525 = vmax.f32 %v1509, 0.0
      %v1526 = vmax.f32 %v1510, 0.0
      %v1527 = vmax.f32 %v1511, 0.0
      %v1528 = vmax.f32 %v1512, 0.0
      %v1529 = vpack.c.bf16 %v1408, %v1408
      %v1530 = vpack.c.bf16 %v1410, %v1410
      %v1531 = vpack.c.bf16 %v1413, %v1413
      %v1532 = vpack.c.bf16 %v1415, %v1415
      %v1533 = vpack.c.bf16 %v1418, %v1418
      %v1534 = vpack.c.bf16 %v1420, %v1420
      %v1535 = vpack.c.bf16 %v1423, %v1423
      %v1536 = vpack.c.bf16 %v1425, %v1425
      %v1537 = vpack.c.bf16 %v1428, %v1428
      %v1538 = vpack.c.bf16 %v1430, %v1430
      %v1539 = vpack.c.bf16 %v1433, %v1433
      %v1540 = vpack.c.bf16 %v1435, %v1435
      %v1541 = vpack.c.bf16 %v1438, %v1438
      %v1542 = vpack.c.bf16 %v1440, %v1440
      %v1543 = vpack.c.bf16 %v1443, %v1443
      %v1544 = vpack.c.bf16 %v1445, %v1445
      %v1547 = vunpack.c.l.b16 %v1529
      %v1548 = vunpack.c.l.b16 %v1530
      %v1549 = vpack.c.b16 %v1548, %v1547
      %1551 = vmatpush.bf16.msra.mxu0 0
      %1552 = vmatpush.bf16.msra.mxu0 0
      %1553 = vmatpush.bf16.msra.mxu0 0
      %1554 = vmatpush.bf16.msra.mxu0 0
      %1555 = vmatpush.bf16.msra.mxu0 0
      %1556 = vmatpush.bf16.msra.mxu0 0
      %1557 = vmatpush.bf16.msra.mxu0 0
      %1558 = vmatpush.bf16.msra.mxu0 %v1549
      %1559 = vmatmul.bf16.gmra.mxu0 %v505
      %v1560 = vpop.f32.mrf.mxu0
      %v1561 = vadd.f32 0.0, %v1560
      %v1562 = vpop.f32.mrf.mxu0
      %v1563 = vadd.f32 0.0, %v1562
      %1564 = vdwg.mxu0
      %v1567 = vunpack.c.l.b16 %v1531
      %v1568 = vunpack.c.l.b16 %v1532
      %v1569 = vpack.c.b16 %v1568, %v1567
      %1571 = vmatpush.bf16.msra.mxu0 0
      %1572 = vmatpush.bf16.msra.mxu0 0
      %1573 = vmatpush.bf16.msra.mxu0 0
      %1574 = vmatpush.bf16.msra.mxu0 0
      %1575 = vmatpush.bf16.msra.mxu0 0
      %1576 = vmatpush.bf16.msra.mxu0 0
      %1577 = vmatpush.bf16.msra.mxu0 0
      %1578 = vmatpush.bf16.msra.mxu0 %v1569
      %1579 = vmatmul.bf16.gmra.mxu0 %v533
      %v1580 = vpop.f32.mrf.mxu0
      %v1581 = vadd.f32 0.0, %v1580
      %v1582 = vpop.f32.mrf.mxu0
      %v1583 = vadd.f32 0.0, %v1582
      %1584 = vdwg.mxu0
      %v1587 = vunpack.c.l.b16 %v1533
      %v1588 = vunpack.c.l.b16 %v1534
      %v1589 = vpack.c.b16 %v1588, %v1587
      %1591 = vmatpush.bf16.msra.mxu0 0
      %1592 = vmatpush.bf16.msra.mxu0 0
      %1593 = vmatpush.bf16.msra.mxu0 0
      %1594 = vmatpush.bf16.msra.mxu0 0
      %1595 = vmatpush.bf16.msra.mxu0 0
      %1596 = vmatpush.bf16.msra.mxu0 0
      %1597 = vmatpush.bf16.msra.mxu0 0
      %1598 = vmatpush.bf16.msra.mxu0 %v1589
      %1599 = vmatmul.bf16.gmra.mxu0 %v561
      %v1600 = vpop.f32.mrf.mxu0
      %v1601 = vadd.f32 0.0, %v1600
      %v1602 = vpop.f32.mrf.mxu0
      %v1603 = vadd.f32 0.0, %v1602
      %1604 = vdwg.mxu0
      %v1607 = vunpack.c.l.b16 %v1535
      %v1608 = vunpack.c.l.b16 %v1536
      %v1609 = vpack.c.b16 %v1608, %v1607
      %1611 = vmatpush.bf16.msra.mxu0 0
      %1612 = vmatpush.bf16.msra.mxu0 0
      %1613 = vmatpush.bf16.msra.mxu0 0
      %1614 = vmatpush.bf16.msra.mxu0 0
      %1615 = vmatpush.bf16.msra.mxu0 0
      %1616 = vmatpush.bf16.msra.mxu0 0
      %1617 = vmatpush.bf16.msra.mxu0 0
      %1618 = vmatpush.bf16.msra.mxu0 %v1609
      %1619 = vmatmul.bf16.gmra.mxu0 %v589
      %v1620 = vpop.f32.mrf.mxu0
      %v1621 = vadd.f32 0.0, %v1620
      %v1622 = vpop.f32.mrf.mxu0
      %v1623 = vadd.f32 0.0, %v1622
      %1624 = vdwg.mxu0
      %v1627 = vunpack.c.l.b16 %v1537
      %v1628 = vunpack.c.l.b16 %v1538
      %v1629 = vpack.c.b16 %v1628, %v1627
      %1631 = vmatpush.bf16.msra.mxu0 0
      %1632 = vmatpush.bf16.msra.mxu0 0
      %1633 = vmatpush.bf16.msra.mxu0 0
      %1634 = vmatpush.bf16.msra.mxu0 0
      %1635 = vmatpush.bf16.msra.mxu0 0
      %1636 = vmatpush.bf16.msra.mxu0 0
      %1637 = vmatpush.bf16.msra.mxu0 0
      %1638 = vmatpush.bf16.msra.mxu0 %v1629
      %1639 = vmatmul.bf16.gmra.mxu0 %v617
      %v1640 = vpop.f32.mrf.mxu0
      %v1641 = vadd.f32 0.0, %v1640
      %v1642 = vpop.f32.mrf.mxu0
      %v1643 = vadd.f32 0.0, %v1642
      %1644 = vdwg.mxu0
      %v1647 = vunpack.c.l.b16 %v1539
      %v1648 = vunpack.c.l.b16 %v1540
      %v1649 = vpack.c.b16 %v1648, %v1647
      %1651 = vmatpush.bf16.msra.mxu0 0
      %1652 = vmatpush.bf16.msra.mxu0 0
      %1653 = vmatpush.bf16.msra.mxu0 0
      %1654 = vmatpush.bf16.msra.mxu0 0
      %1655 = vmatpush.bf16.msra.mxu0 0
      %1656 = vmatpush.bf16.msra.mxu0 0
      %1657 = vmatpush.bf16.msra.mxu0 0
      %1658 = vmatpush.bf16.msra.mxu0 %v1649
      %1659 = vmatmul.bf16.gmra.mxu0 %v645
      %v1660 = vpop.f32.mrf.mxu0
      %v1661 = vadd.f32 0.0, %v1660
      %v1662 = vpop.f32.mrf.mxu0
      %v1663 = vadd.f32 0.0, %v1662
      %1664 = vdwg.mxu0
      %v1667 = vunpack.c.l.b16 %v1541
      %v1668 = vunpack.c.l.b16 %v1542
      %v1669 = vpack.c.b16 %v1668, %v1667
      %1671 = vmatpush.bf16.msra.mxu0 0
      %1672 = vmatpush.bf16.msra.mxu0 0
      %1673 = vmatpush.bf16.msra.mxu0 0
      %1674 = vmatpush.bf16.msra.mxu0 0
      %1675 = vmatpush.bf16.msra.mxu0 0
      %1676 = vmatpush.bf16.msra.mxu0 0
      %1677 = vmatpush.bf16.msra.mxu0 0
      %1678 = vmatpush.bf16.msra.mxu0 %v1669
      %1679 = vmatmul.bf16.gmra.mxu0 %v673
      %v1680 = vpop.f32.mrf.mxu0
      %v1681 = vadd.f32 0.0, %v1680
      %v1682 = vpop.f32.mrf.mxu0
      %v1683 = vadd.f32 0.0, %v1682
      %1684 = vdwg.mxu0
      %v1687 = vunpack.c.l.b16 %v1543
      %v1688 = vunpack.c.l.b16 %v1544
      %v1689 = vpack.c.b16 %v1688, %v1687
      %1691 = vmatpush.bf16.msra.mxu0 0
      %1692 = vmatpush.bf16.msra.mxu0 0
      %1693 = vmatpush.bf16.msra.mxu0 0
      %1694 = vmatpush.bf16.msra.mxu0 0
      %1695 = vmatpush.bf16.msra.mxu0 0
      %1696 = vmatpush.bf16.msra.mxu0 0
      %1697 = vmatpush.bf16.msra.mxu0 0
      %1698 = vmatpush.bf16.msra.mxu0 %v1689
      %1699 = vmatmul.bf16.gmra.mxu0 %v701
      %v1700 = vpop.f32.mrf.mxu0
      %v1701 = vadd.f32 0.0, %v1700
      %v1702 = vpop.f32.mrf.mxu0
      %v1703 = vadd.f32 0.0, %v1702
      %1704 = vdwg.mxu0
      %v1705 = vperm.slane %v238, 0
      %v1706 = vadd.f32 %v1561, %v1705
      %v1707 = vadd.f32 %v1563, %v1705
      %v1708 = vadd.f32 %v1581, %v1705
      %v1709 = vadd.f32 %v1583, %v1705
      %v1710 = vadd.f32 %v1601, %v1705
      %v1711 = vadd.f32 %v1603, %v1705
      %v1712 = vadd.f32 %v1621, %v1705
      %v1713 = vadd.f32 %v1623, %v1705
      %v1714 = vadd.f32 %v1641, %v1705
      %v1715 = vadd.f32 %v1643, %v1705
      %v1716 = vadd.f32 %v1661, %v1705
      %v1717 = vadd.f32 %v1663, %v1705
      %v1718 = vadd.f32 %v1681, %v1705
      %v1719 = vadd.f32 %v1683, %v1705
      %v1720 = vadd.f32 %v1701, %v1705
      %v1721 = vadd.f32 %v1703, %v1705
      %v1722 = vmax.f32 %v1706, 0.0
      %v1723 = vmax.f32 %v1707, 0.0
      %v1724 = vmax.f32 %v1708, 0.0
      %v1725 = vmax.f32 %v1709, 0.0
      %v1726 = vmax.f32 %v1710, 0.0
      %v1727 = vmax.f32 %v1711, 0.0
      %v1728 = vmax.f32 %v1712, 0.0
      %v1729 = vmax.f32 %v1713, 0.0
      %v1730 = vmax.f32 %v1714, 0.0
      %v1731 = vmax.f32 %v1715, 0.0
      %v1732 = vmax.f32 %v1716, 0.0
      %v1733 = vmax.f32 %v1717, 0.0
      %v1734 = vmax.f32 %v1718, 0.0
      %v1735 = vmax.f32 %v1719, 0.0
      %v1736 = vmax.f32 %v1720, 0.0
      %v1737 = vmax.f32 %v1721, 0.0
      %v1738 = vadd.f32 %v1722, %v1513
      %v1739 = vadd.f32 %v1723, %v1514
      %v1740 = vadd.f32 %v1724, %v1515
      %v1741 = vadd.f32 %v1725, %v1516
      %v1742 = vadd.f32 %v1726, %v1517
      %v1743 = vadd.f32 %v1727, %v1518
      %v1744 = vadd.f32 %v1728, %v1519
      %v1745 = vadd.f32 %v1729, %v1520
      %v1746 = vadd.f32 %v1730, %v1521
      %v1747 = vadd.f32 %v1731, %v1522
      %v1748 = vadd.f32 %v1732, %v1523
      %v1749 = vadd.f32 %v1733, %v1524
      %v1750 = vadd.f32 %v1734, %v1525
      %v1751 = vadd.f32 %v1735, %v1526
      %v1752 = vadd.f32 %v1736, %v1527
      %v1753 = vadd.f32 %v1737, %v1528
      %v1754 = vperm.slane %v238, 2
      %v1755 = vmul.f32 %v1738, %v1754
      %v1756 = vmul.f32 %v1739, %v1754
      %v1757 = vmul.f32 %v1740, %v1754
      %v1758 = vmul.f32 %v1741, %v1754
      %v1759 = vmul.f32 %v1742, %v1754
      %v1760 = vmul.f32 %v1743, %v1754
      %v1761 = vmul.f32 %v1744, %v1754
      %v1762 = vmul.f32 %v1745, %v1754
      %v1763 = vmul.f32 %v1746, %v1754
      %v1764 = vmul.f32 %v1747, %v1754
      %v1765 = vmul.f32 %v1748, %v1754
      %v1766 = vmul.f32 %v1749, %v1754
      %v1767 = vmul.f32 %v1750, %v1754
      %v1768 = vmul.f32 %v1751, %v1754
      %v1769 = vmul.f32 %v1752, %v1754
      %v1770 = vmul.f32 %v1753, %v1754
      %v1771 = vperm.slane %v238, 3
      %v1772 = vadd.f32 %v1755, %v1771
      %v1773 = vadd.f32 %v1756, %v1771
      %v1774 = vadd.f32 %v1757, %v1771
      %v1775 = vadd.f32 %v1758, %v1771
      %v1776 = vadd.f32 %v1759, %v1771
      %v1777 = vadd.f32 %v1760, %v1771
      %v1778 = vadd.f32 %v1761, %v1771
      %v1779 = vadd.f32 %v1762, %v1771
      %v1780 = vadd.f32 %v1763, %v1771
      %v1781 = vadd.f32 %v1764, %v1771
      %v1782 = vadd.f32 %v1765, %v1771
      %v1783 = vadd.f32 %v1766, %v1771
      %v1784 = vadd.f32 %v1767, %v1771
      %v1785 = vadd.f32 %v1768, %v1771
      %v1786 = vadd.f32 %v1769, %v1771
      %v1787 = vadd.f32 %v1770, %v1771
      %v1788 = vperm.slane %v238, 4
      %v1789 = vmul.f32 %v1772, %v1788
      %v1790 = vmul.f32 %v1773, %v1788
      %v1791 = vmul.f32 %v1774, %v1788
      %v1792 = vmul.f32 %v1775, %v1788
      %v1793 = vmul.f32 %v1776, %v1788
      %v1794 = vmul.f32 %v1777, %v1788
      %v1795 = vmul.f32 %v1778, %v1788
      %v1796 = vmul.f32 %v1779, %v1788
      %v1797 = vmul.f32 %v1780, %v1788
      %v1798 = vmul.f32 %v1781, %v1788
      %v1799 = vmul.f32 %v1782, %v1788
      %v1800 = vmul.f32 %v1783, %v1788
      %v1801 = vmul.f32 %v1784, %v1788
      %v1802 = vmul.f32 %v1785, %v1788
      %v1803 = vmul.f32 %v1786, %v1788
      %v1804 = vmul.f32 %v1787, %v1788
      %1805 = vadd.xlane.f32.xlu0 %v1789
      %v1806 = vpop.xlane.xlu0 %1805
      %1807 = vadd.xlane.f32.xlu0 %v1790
      %v1808 = vpop.xlane.xlu0 %1807
      %1809 = vadd.xlane.f32.xlu0 %v1791
      %v1810 = vpop.xlane.xlu0 %1809
      %1811 = vadd.xlane.f32.xlu0 %v1792
      %v1812 = vpop.xlane.xlu0 %1811
      %1813 = vadd.xlane.f32.xlu0 %v1793
      %v1814 = vpop.xlane.xlu0 %1813
      %1815 = vadd.xlane.f32.xlu0 %v1794
      %v1816 = vpop.xlane.xlu0 %1815
      %1817 = vadd.xlane.f32.xlu0 %v1795
      %v1818 = vpop.xlane.xlu0 %1817
      %1819 = vadd.xlane.f32.xlu0 %v1796
      %v1820 = vpop.xlane.xlu0 %1819
      %1821 = vadd.xlane.f32.xlu0 %v1797
      %v1822 = vpop.xlane.xlu0 %1821
      %1823 = vadd.xlane.f32.xlu0 %v1798
      %v1824 = vpop.xlane.xlu0 %1823
      %1825 = vadd.xlane.f32.xlu0 %v1799
      %v1826 = vpop.xlane.xlu0 %1825
      %1827 = vadd.xlane.f32.xlu0 %v1800
      %v1828 = vpop.xlane.xlu0 %1827
      %1829 = vadd.xlane.f32.xlu0 %v1801
      %v1830 = vpop.xlane.xlu0 %1829
      %1831 = vadd.xlane.f32.xlu0 %v1802
      %v1832 = vpop.xlane.xlu0 %1831
      %1833 = vadd.xlane.f32.xlu0 %v1803
      %v1834 = vpop.xlane.xlu0 %1833
      %1835 = vadd.xlane.f32.xlu0 %v1804
      %v1836 = vpop.xlane.xlu0 %1835
      %v1837 = vperm.slane %v238, 5
      %v1838 = vadd.f32 %v1806, %v1837
      %v1839 = vadd.f32 %v1808, %v1837
      %v1840 = vadd.f32 %v1810, %v1837
      %v1841 = vadd.f32 %v1812, %v1837
      %v1842 = vadd.f32 %v1814, %v1837
      %v1843 = vadd.f32 %v1816, %v1837
      %v1844 = vadd.f32 %v1818, %v1837
      %v1845 = vadd.f32 %v1820, %v1837
      %v1846 = vadd.f32 %v1822, %v1837
      %v1847 = vadd.f32 %v1824, %v1837
      %v1848 = vadd.f32 %v1826, %v1837
      %v1849 = vadd.f32 %v1828, %v1837
      %v1850 = vadd.f32 %v1830, %v1837
      %v1851 = vadd.f32 %v1832, %v1837
      %v1852 = vadd.f32 %v1834, %v1837
      %v1853 = vadd.f32 %v1836, %v1837
      %v1854 = vxor.u32 %v1838, 2147483648
      %v1855 = vxor.u32 %v1839, 2147483648
      %v1856 = vxor.u32 %v1840, 2147483648
      %v1857 = vxor.u32 %v1841, 2147483648
      %v1858 = vxor.u32 %v1842, 2147483648
      %v1859 = vxor.u32 %v1843, 2147483648
      %v1860 = vxor.u32 %v1844, 2147483648
      %v1861 = vxor.u32 %v1845, 2147483648
      %v1862 = vxor.u32 %v1846, 2147483648
      %v1863 = vxor.u32 %v1847, 2147483648
      %v1864 = vxor.u32 %v1848, 2147483648
      %v1865 = vxor.u32 %v1849, 2147483648
      %v1866 = vxor.u32 %v1850, 2147483648
      %v1867 = vxor.u32 %v1851, 2147483648
      %v1868 = vxor.u32 %v1852, 2147483648
      %v1869 = vxor.u32 %v1853, 2147483648
      %v1870 = vmul.f32 %v1854, 1.442695
      %v1871 = vpow.pop %v1870
      %v1872 = vmul.f32 %v1855, 1.442695
      %v1873 = vpow.pop %v1872
      %v1874 = vmul.f32 %v1856, 1.442695
      %v1875 = vpow.pop %v1874
      %v1876 = vmul.f32 %v1857, 1.442695
      %v1877 = vpow.pop %v1876
      %v1878 = vmul.f32 %v1858, 1.442695
      %v1879 = vpow.pop %v1878
      %v1880 = vmul.f32 %v1859, 1.442695
      %v1881 = vpow.pop %v1880
      %v1882 = vmul.f32 %v1860, 1.442695
      %v1883 = vpow.pop %v1882
      %v1884 = vmul.f32 %v1861, 1.442695
      %v1885 = vpow.pop %v1884
      %v1886 = vmul.f32 %v1862, 1.442695
      %v1887 = vpow.pop %v1886
      %v1888 = vmul.f32 %v1863, 1.442695
      %v1889 = vpow.pop %v1888
      %v1890 = vmul.f32 %v1864, 1.442695
      %v1891 = vpow.pop %v1890
      %v1892 = vmul.f32 %v1865, 1.442695
      %v1893 = vpow.pop %v1892
      %v1894 = vmul.f32 %v1866, 1.442695
      %v1895 = vpow.pop %v1894
      %v1896 = vmul.f32 %v1867, 1.442695
      %v1897 = vpow.pop %v1896
      %v1898 = vmul.f32 %v1868, 1.442695
      %v1899 = vpow.pop %v1898
      %v1900 = vmul.f32 %v1869, 1.442695
      %v1901 = vpow.pop %v1900
      %v1902 = vadd.f32 %v1871, 1.0
      %v1903 = vadd.f32 %v1873, 1.0
      %v1904 = vadd.f32 %v1875, 1.0
      %v1905 = vadd.f32 %v1877, 1.0
      %v1906 = vadd.f32 %v1879, 1.0
      %v1907 = vadd.f32 %v1881, 1.0
      %v1908 = vadd.f32 %v1883, 1.0
      %v1909 = vadd.f32 %v1885, 1.0
      %v1910 = vadd.f32 %v1887, 1.0
      %v1911 = vadd.f32 %v1889, 1.0
      %v1912 = vadd.f32 %v1891, 1.0
      %v1913 = vadd.f32 %v1893, 1.0
      %v1914 = vadd.f32 %v1895, 1.0
      %v1915 = vadd.f32 %v1897, 1.0
      %v1916 = vadd.f32 %v1899, 1.0
      %v1917 = vadd.f32 %v1901, 1.0
      %v1918 = vrcp.pop %v1902
      %v1919 = vmul.f32 %v1902, %v1918
      %v1920 = vsub.f32 1.0, %v1919
      %v1921 = vmul.f32 %v1918, %v1920
      %v1922 = vadd.f32 %v1918, %v1921
      %vm1923 = vweird.f32 %v1902
      %vm1924 = vweird.f32 %v1918
      %vm1925 = vmor %vm1923, %vm1924
      %v1926 = vsel %vm1925, %v1918, %v1922
      %v1927 = vand.u32 2147483647, %v1902
      %vm1928 = vcmp.eq.f32.partialorder %v1927, 8.507059e+37
      %v1929 = vand.u32 %v1902, 2147483648
      %v1930 = vor.u32 1.1754944e-38, %v1929
      %v1931 = vsel %vm1928, %v1930, %v1926
      %v1932 = vmul.f32 1.0, %v1931
      %v1933 = vrcp.pop %v1903
      %v1934 = vmul.f32 %v1903, %v1933
      %v1935 = vsub.f32 1.0, %v1934
      %v1936 = vmul.f32 %v1933, %v1935
      %v1937 = vadd.f32 %v1933, %v1936
      %vm1938 = vweird.f32 %v1903
      %vm1939 = vweird.f32 %v1933
      %vm1940 = vmor %vm1938, %vm1939
      %v1941 = vsel %vm1940, %v1933, %v1937
      %v1942 = vand.u32 2147483647, %v1903
      %vm1943 = vcmp.eq.f32.partialorder %v1942, 8.507059e+37
      %v1944 = vand.u32 %v1903, 2147483648
      %v1945 = vor.u32 1.1754944e-38, %v1944
      %v1946 = vsel %vm1943, %v1945, %v1941
      %v1947 = vmul.f32 1.0, %v1946
      %v1948 = vrcp.pop %v1904
      %v1949 = vmul.f32 %v1904, %v1948
      %v1950 = vsub.f32 1.0, %v1949
      %v1951 = vmul.f32 %v1948, %v1950
      %v1952 = vadd.f32 %v1948, %v1951
      %vm1953 = vweird.f32 %v1904
      %vm1954 = vweird.f32 %v1948
      %vm1955 = vmor %vm1953, %vm1954
      %v1956 = vsel %vm1955, %v1948, %v1952
      %v1957 = vand.u32 2147483647, %v1904
      %vm1958 = vcmp.eq.f32.partialorder %v1957, 8.507059e+37
      %v1959 = vand.u32 %v1904, 2147483648
      %v1960 = vor.u32 1.1754944e-38, %v1959
      %v1961 = vsel %vm1958, %v1960, %v1956
      %v1962 = vmul.f32 1.0, %v1961
      %v1963 = vrcp.pop %v1905
      %v1964 = vmul.f32 %v1905, %v1963
      %v1965 = vsub.f32 1.0, %v1964
      %v1966 = vmul.f32 %v1963, %v1965
      %v1967 = vadd.f32 %v1963, %v1966
      %vm1968 = vweird.f32 %v1905
      %vm1969 = vweird.f32 %v1963
      %vm1970 = vmor %vm1968, %vm1969
      %v1971 = vsel %vm1970, %v1963, %v1967
      %v1972 = vand.u32 2147483647, %v1905
      %vm1973 = vcmp.eq.f32.partialorder %v1972, 8.507059e+37
      %v1974 = vand.u32 %v1905, 2147483648
      %v1975 = vor.u32 1.1754944e-38, %v1974
      %v1976 = vsel %vm1973, %v1975, %v1971
      %v1977 = vmul.f32 1.0, %v1976
      %v1978 = vrcp.pop %v1906
      %v1979 = vmul.f32 %v1906, %v1978
      %v1980 = vsub.f32 1.0, %v1979
      %v1981 = vmul.f32 %v1978, %v1980
      %v1982 = vadd.f32 %v1978, %v1981
      %vm1983 = vweird.f32 %v1906
      %vm1984 = vweird.f32 %v1978
      %vm1985 = vmor %vm1983, %vm1984
      %v1986 = vsel %vm1985, %v1978, %v1982
      %v1987 = vand.u32 2147483647, %v1906
      %vm1988 = vcmp.eq.f32.partialorder %v1987, 8.507059e+37
      %v1989 = vand.u32 %v1906, 2147483648
      %v1990 = vor.u32 1.1754944e-38, %v1989
      %v1991 = vsel %vm1988, %v1990, %v1986
      %v1992 = vmul.f32 1.0, %v1991
      %v1993 = vrcp.pop %v1907
      %v1994 = vmul.f32 %v1907, %v1993
      %v1995 = vsub.f32 1.0, %v1994
      %v1996 = vmul.f32 %v1993, %v1995
      %v1997 = vadd.f32 %v1993, %v1996
      %vm1998 = vweird.f32 %v1907
      %vm1999 = vweird.f32 %v1993
      %vm2000 = vmor %vm1998, %vm1999
      %v2001 = vsel %vm2000, %v1993, %v1997
      %v2002 = vand.u32 2147483647, %v1907
      %vm2003 = vcmp.eq.f32.partialorder %v2002, 8.507059e+37
      %v2004 = vand.u32 %v1907, 2147483648
      %v2005 = vor.u32 1.1754944e-38, %v2004
      %v2006 = vsel %vm2003, %v2005, %v2001
      %v2007 = vmul.f32 1.0, %v2006
      %v2008 = vrcp.pop %v1908
      %v2009 = vmul.f32 %v1908, %v2008
      %v2010 = vsub.f32 1.0, %v2009
      %v2011 = vmul.f32 %v2008, %v2010
      %v2012 = vadd.f32 %v2008, %v2011
      %vm2013 = vweird.f32 %v1908
      %vm2014 = vweird.f32 %v2008
      %vm2015 = vmor %vm2013, %vm2014
      %v2016 = vsel %vm2015, %v2008, %v2012
      %v2017 = vand.u32 2147483647, %v1908
      %vm2018 = vcmp.eq.f32.partialorder %v2017, 8.507059e+37
      %v2019 = vand.u32 %v1908, 2147483648
      %v2020 = vor.u32 1.1754944e-38, %v2019
      %v2021 = vsel %vm2018, %v2020, %v2016
      %v2022 = vmul.f32 1.0, %v2021
      %v2023 = vrcp.pop %v1909
      %v2024 = vmul.f32 %v1909, %v2023
      %v2025 = vsub.f32 1.0, %v2024
      %v2026 = vmul.f32 %v2023, %v2025
      %v2027 = vadd.f32 %v2023, %v2026
      %vm2028 = vweird.f32 %v1909
      %vm2029 = vweird.f32 %v2023
      %vm2030 = vmor %vm2028, %vm2029
      %v2031 = vsel %vm2030, %v2023, %v2027
      %v2032 = vand.u32 2147483647, %v1909
      %vm2033 = vcmp.eq.f32.partialorder %v2032, 8.507059e+37
      %v2034 = vand.u32 %v1909, 2147483648
      %v2035 = vor.u32 1.1754944e-38, %v2034
      %v2036 = vsel %vm2033, %v2035, %v2031
      %v2037 = vmul.f32 1.0, %v2036
      %v2038 = vrcp.pop %v1910
      %v2039 = vmul.f32 %v1910, %v2038
      %v2040 = vsub.f32 1.0, %v2039
      %v2041 = vmul.f32 %v2038, %v2040
      %v2042 = vadd.f32 %v2038, %v2041
      %vm2043 = vweird.f32 %v1910
      %vm2044 = vweird.f32 %v2038
      %vm2045 = vmor %vm2043, %vm2044
      %v2046 = vsel %vm2045, %v2038, %v2042
      %v2047 = vand.u32 2147483647, %v1910
      %vm2048 = vcmp.eq.f32.partialorder %v2047, 8.507059e+37
      %v2049 = vand.u32 %v1910, 2147483648
      %v2050 = vor.u32 1.1754944e-38, %v2049
      %v2051 = vsel %vm2048, %v2050, %v2046
      %v2052 = vmul.f32 1.0, %v2051
      %v2053 = vrcp.pop %v1911
      %v2054 = vmul.f32 %v1911, %v2053
      %v2055 = vsub.f32 1.0, %v2054
      %v2056 = vmul.f32 %v2053, %v2055
      %v2057 = vadd.f32 %v2053, %v2056
      %vm2058 = vweird.f32 %v1911
      %vm2059 = vweird.f32 %v2053
      %vm2060 = vmor %vm2058, %vm2059
      %v2061 = vsel %vm2060, %v2053, %v2057
      %v2062 = vand.u32 2147483647, %v1911
      %vm2063 = vcmp.eq.f32.partialorder %v2062, 8.507059e+37
      %v2064 = vand.u32 %v1911, 2147483648
      %v2065 = vor.u32 1.1754944e-38, %v2064
      %v2066 = vsel %vm2063, %v2065, %v2061
      %v2067 = vmul.f32 1.0, %v2066
      %v2068 = vrcp.pop %v1912
      %v2069 = vmul.f32 %v1912, %v2068
      %v2070 = vsub.f32 1.0, %v2069
      %v2071 = vmul.f32 %v2068, %v2070
      %v2072 = vadd.f32 %v2068, %v2071
      %vm2073 = vweird.f32 %v1912
      %vm2074 = vweird.f32 %v2068
      %vm2075 = vmor %vm2073, %vm2074
      %v2076 = vsel %vm2075, %v2068, %v2072
      %v2077 = vand.u32 2147483647, %v1912
      %vm2078 = vcmp.eq.f32.partialorder %v2077, 8.507059e+37
      %v2079 = vand.u32 %v1912, 2147483648
      %v2080 = vor.u32 1.1754944e-38, %v2079
      %v2081 = vsel %vm2078, %v2080, %v2076
      %v2082 = vmul.f32 1.0, %v2081
      %v2083 = vrcp.pop %v1913
      %v2084 = vmul.f32 %v1913, %v2083
      %v2085 = vsub.f32 1.0, %v2084
      %v2086 = vmul.f32 %v2083, %v2085
      %v2087 = vadd.f32 %v2083, %v2086
      %vm2088 = vweird.f32 %v1913
      %vm2089 = vweird.f32 %v2083
      %vm2090 = vmor %vm2088, %vm2089
      %v2091 = vsel %vm2090, %v2083, %v2087
      %v2092 = vand.u32 2147483647, %v1913
      %vm2093 = vcmp.eq.f32.partialorder %v2092, 8.507059e+37
      %v2094 = vand.u32 %v1913, 2147483648
      %v2095 = vor.u32 1.1754944e-38, %v2094
      %v2096 = vsel %vm2093, %v2095, %v2091
      %v2097 = vmul.f32 1.0, %v2096
      %v2098 = vrcp.pop %v1914
      %v2099 = vmul.f32 %v1914, %v2098
      %v2100 = vsub.f32 1.0, %v2099
      %v2101 = vmul.f32 %v2098, %v2100
      %v2102 = vadd.f32 %v2098, %v2101
      %vm2103 = vweird.f32 %v1914
      %vm2104 = vweird.f32 %v2098
      %vm2105 = vmor %vm2103, %vm2104
      %v2106 = vsel %vm2105, %v2098, %v2102
      %v2107 = vand.u32 2147483647, %v1914
      %vm2108 = vcmp.eq.f32.partialorder %v2107, 8.507059e+37
      %v2109 = vand.u32 %v1914, 2147483648
      %v2110 = vor.u32 1.1754944e-38, %v2109
      %v2111 = vsel %vm2108, %v2110, %v2106
      %v2112 = vmul.f32 1.0, %v2111
      %v2113 = vrcp.pop %v1915
      %v2114 = vmul.f32 %v1915, %v2113
      %v2115 = vsub.f32 1.0, %v2114
      %v2116 = vmul.f32 %v2113, %v2115
      %v2117 = vadd.f32 %v2113, %v2116
      %vm2118 = vweird.f32 %v1915
      %vm2119 = vweird.f32 %v2113
      %vm2120 = vmor %vm2118, %vm2119
      %v2121 = vsel %vm2120, %v2113, %v2117
      %v2122 = vand.u32 2147483647, %v1915
      %vm2123 = vcmp.eq.f32.partialorder %v2122, 8.507059e+37
      %v2124 = vand.u32 %v1915, 2147483648
      %v2125 = vor.u32 1.1754944e-38, %v2124
      %v2126 = vsel %vm2123, %v2125, %v2121
      %v2127 = vmul.f32 1.0, %v2126
      %v2128 = vrcp.pop %v1916
      %v2129 = vmul.f32 %v1916, %v2128
      %v2130 = vsub.f32 1.0, %v2129
      %v2131 = vmul.f32 %v2128, %v2130
      %v2132 = vadd.f32 %v2128, %v2131
      %vm2133 = vweird.f32 %v1916
      %vm2134 = vweird.f32 %v2128
      %vm2135 = vmor %vm2133, %vm2134
      %v2136 = vsel %vm2135, %v2128, %v2132
      %v2137 = vand.u32 2147483647, %v1916
      %vm2138 = vcmp.eq.f32.partialorder %v2137, 8.507059e+37
      %v2139 = vand.u32 %v1916, 2147483648
      %v2140 = vor.u32 1.1754944e-38, %v2139
      %v2141 = vsel %vm2138, %v2140, %v2136
      %v2142 = vmul.f32 1.0, %v2141
      %v2143 = vrcp.pop %v1917
      %v2144 = vmul.f32 %v1917, %v2143
      %v2145 = vsub.f32 1.0, %v2144
      %v2146 = vmul.f32 %v2143, %v2145
      %v2147 = vadd.f32 %v2143, %v2146
      %vm2148 = vweird.f32 %v1917
      %vm2149 = vweird.f32 %v2143
      %vm2150 = vmor %vm2148, %vm2149
      %v2151 = vsel %vm2150, %v2143, %v2147
      %v2152 = vand.u32 2147483647, %v1917
      %vm2153 = vcmp.eq.f32.partialorder %v2152, 8.507059e+37
      %v2154 = vand.u32 %v1917, 2147483648
      %v2155 = vor.u32 1.1754944e-38, %v2154
      %v2156 = vsel %vm2153, %v2155, %v2151
      %v2157 = vmul.f32 1.0, %v2156
      %2159 = vset.pattern.permute.xlu0 0
      %2160 = vperm.xlu0 %2159, %v1932
      %v2161 = vpop.permute.xlu0 %2160
      %2164 = vset.pattern.permute.xlu0 0
      %2165 = vperm.xlu0 %2164, %v1947
      %v2166 = vpop.permute.xlu0 %2165
      %2169 = vset.pattern.permute.xlu0 0
      %2170 = vperm.xlu0 %2169, %v1962
      %v2171 = vpop.permute.xlu0 %2170
      %2174 = vset.pattern.permute.xlu0 0
      %2175 = vperm.xlu0 %2174, %v1977
      %v2176 = vpop.permute.xlu0 %2175
      %2179 = vset.pattern.permute.xlu0 0
      %2180 = vperm.xlu0 %2179, %v1992
      %v2181 = vpop.permute.xlu0 %2180
      %2184 = vset.pattern.permute.xlu0 0
      %2185 = vperm.xlu0 %2184, %v2007
      %v2186 = vpop.permute.xlu0 %2185
      %2189 = vset.pattern.permute.xlu0 0
      %2190 = vperm.xlu0 %2189, %v2022
      %v2191 = vpop.permute.xlu0 %2190
      %2194 = vset.pattern.permute.xlu0 0
      %2195 = vperm.xlu0 %2194, %v2037
      %v2196 = vpop.permute.xlu0 %2195
      %2199 = vset.pattern.permute.xlu0 0
      %2200 = vperm.xlu0 %2199, %v2052
      %v2201 = vpop.permute.xlu0 %2200
      %2204 = vset.pattern.permute.xlu0 0
      %2205 = vperm.xlu0 %2204, %v2067
      %v2206 = vpop.permute.xlu0 %2205
      %2209 = vset.pattern.permute.xlu0 0
      %2210 = vperm.xlu0 %2209, %v2082
      %v2211 = vpop.permute.xlu0 %2210
      %2214 = vset.pattern.permute.xlu0 0
      %2215 = vperm.xlu0 %2214, %v2097
      %v2216 = vpop.permute.xlu0 %2215
      %2219 = vset.pattern.permute.xlu0 0
      %2220 = vperm.xlu0 %2219, %v2112
      %v2221 = vpop.permute.xlu0 %2220
      %2224 = vset.pattern.permute.xlu0 0
      %2225 = vperm.xlu0 %2224, %v2127
      %v2226 = vpop.permute.xlu0 %2225
      %2229 = vset.pattern.permute.xlu0 0
      %2230 = vperm.xlu0 %2229, %v2142
      %v2231 = vpop.permute.xlu0 %2230
      %2234 = vset.pattern.permute.xlu0 0
      %2235 = vperm.xlu0 %2234, %v2157
      %v2236 = vpop.permute.xlu0 %2235
      %v2238 = vmul.f32 %v2161, %v1772
      %v2239 = vmul.f32 %v2166, %v1773
      %v2240 = vmul.f32 %v2171, %v1774
      %v2241 = vmul.f32 %v2176, %v1775
      %v2242 = vmul.f32 %v2181, %v1776
      %v2243 = vmul.f32 %v2186, %v1777
      %v2244 = vmul.f32 %v2191, %v1778
      %v2245 = vmul.f32 %v2196, %v1779
      %v2246 = vmul.f32 %v2201, %v1780
      %v2247 = vmul.f32 %v2206, %v1781
      %v2248 = vmul.f32 %v2211, %v1782
      %v2249 = vmul.f32 %v2216, %v1783
      %v2250 = vmul.f32 %v2221, %v1784
      %v2251 = vmul.f32 %v2226, %v1785
      %v2252 = vmul.f32 %v2231, %v1786
      %v2253 = vmul.f32 %v2236, %v1787
      %v2254 = vadd.f32 %v2238, %v2239
      %v2255 = vrot.slane %v2254, 4
      %v2256 = vadd.f32 %v2254, %v2255
      %v2257 = vrot.slane %v2256, 2
      %v2258 = vadd.f32 %v2256, %v2257
      %v2259 = vrot.slane %v2258, 1
      %v2260 = vadd.f32 %v2258, %v2259
      %v2261 = vadd.f32 %v2240, %v2241
      %v2262 = vrot.slane %v2261, 4
      %v2263 = vadd.f32 %v2261, %v2262
      %v2264 = vrot.slane %v2263, 2
      %v2265 = vadd.f32 %v2263, %v2264
      %v2266 = vrot.slane %v2265, 1
      %v2267 = vadd.f32 %v2265, %v2266
      %v2268 = vadd.f32 %v2242, %v2243
      %v2269 = vrot.slane %v2268, 4
      %v2270 = vadd.f32 %v2268, %v2269
      %v2271 = vrot.slane %v2270, 2
      %v2272 = vadd.f32 %v2270, %v2271
      %v2273 = vrot.slane %v2272, 1
      %v2274 = vadd.f32 %v2272, %v2273
      %v2275 = vadd.f32 %v2244, %v2245
      %v2276 = vrot.slane %v2275, 4
      %v2277 = vadd.f32 %v2275, %v2276
      %v2278 = vrot.slane %v2277, 2
      %v2279 = vadd.f32 %v2277, %v2278
      %v2280 = vrot.slane %v2279, 1
      %v2281 = vadd.f32 %v2279, %v2280
      %v2282 = vadd.f32 %v2246, %v2247
      %v2283 = vrot.slane %v2282, 4
      %v2284 = vadd.f32 %v2282, %v2283
      %v2285 = vrot.slane %v2284, 2
      %v2286 = vadd.f32 %v2284, %v2285
      %v2287 = vrot.slane %v2286, 1
      %v2288 = vadd.f32 %v2286, %v2287
      %v2289 = vadd.f32 %v2248, %v2249
      %v2290 = vrot.slane %v2289, 4
      %v2291 = vadd.f32 %v2289, %v2290
      %v2292 = vrot.slane %v2291, 2
      %v2293 = vadd.f32 %v2291, %v2292
      %v2294 = vrot.slane %v2293, 1
      %v2295 = vadd.f32 %v2293, %v2294
      %v2296 = vadd.f32 %v2250, %v2251
      %v2297 = vrot.slane %v2296, 4
      %v2298 = vadd.f32 %v2296, %v2297
      %v2299 = vrot.slane %v2298, 2
      %v2300 = vadd.f32 %v2298, %v2299
      %v2301 = vrot.slane %v2300, 1
      %v2302 = vadd.f32 %v2300, %v2301
      %v2303 = vadd.f32 %v2252, %v2253
      %v2304 = vrot.slane %v2303, 4
      %v2305 = vadd.f32 %v2303, %v2304
      %v2306 = vrot.slane %v2305, 2
      %v2307 = vadd.f32 %v2305, %v2306
      %v2308 = vrot.slane %v2307, 1
      %v2309 = vadd.f32 %v2307, %v2308
      %vm2310 = vcmask 1040384
      %v2311 = vsel %vm2310, %v2260, %v2267
      %vm2312 = vcmask 1041408
      %v2313 = vsel %vm2312, %v2311, %v2274
      %vm2314 = vcmask 1042432
      %v2315 = vsel %vm2314, %v2313, %v2281
      %vm2316 = vcmask 1043456
      %v2317 = vsel %vm2316, %v2315, %v2288
      %vm2318 = vcmask 1044480
      %v2319 = vsel %vm2318, %v2317, %v2295
      %vm2320 = vcmask 1045504
      %v2321 = vsel %vm2320, %v2319, %v2302
      %vm2322 = vcmask 1046528
      %v2323 = vsel %vm2322, %v2321, %v2309
      %v2324 = vmax.f32 %v1772, %v1773
      %v2325 = vrot.slane %v2324, 4
      %v2326 = vmax.f32 %v2324, %v2325
      %v2327 = vrot.slane %v2326, 2
      %v2328 = vmax.f32 %v2326, %v2327
      %v2329 = vrot.slane %v2328, 1
      %v2330 = vmax.f32 %v2328, %v2329
      %v2331 = vmax.f32 %v1774, %v1775
      %v2332 = vrot.slane %v2331, 4
      %v2333 = vmax.f32 %v2331, %v2332
      %v2334 = vrot.slane %v2333, 2
      %v2335 = vmax.f32 %v2333, %v2334
      %v2336 = vrot.slane %v2335, 1
      %v2337 = vmax.f32 %v2335, %v2336
      %v2338 = vmax.f32 %v1776, %v1777
      %v2339 = vrot.slane %v2338, 4
      %v2340 = vmax.f32 %v2338, %v2339
      %v2341 = vrot.slane %v2340, 2
      %v2342 = vmax.f32 %v2340, %v2341
      %v2343 = vrot.slane %v2342, 1
      %v2344 = vmax.f32 %v2342, %v2343
      %v2345 = vmax.f32 %v1778, %v1779
      %v2346 = vrot.slane %v2345, 4
      %v2347 = vmax.f32 %v2345, %v2346
      %v2348 = vrot.slane %v2347, 2
      %v2349 = vmax.f32 %v2347, %v2348
      %v2350 = vrot.slane %v2349, 1
      %v2351 = vmax.f32 %v2349, %v2350
      %v2352 = vmax.f32 %v1780, %v1781
      %v2353 = vrot.slane %v2352, 4
      %v2354 = vmax.f32 %v2352, %v2353
      %v2355 = vrot.slane %v2354, 2
      %v2356 = vmax.f32 %v2354, %v2355
      %v2357 = vrot.slane %v2356, 1
      %v2358 = vmax.f32 %v2356, %v2357
      %v2359 = vmax.f32 %v1782, %v1783
      %v2360 = vrot.slane %v2359, 4
      %v2361 = vmax.f32 %v2359, %v2360
      %v2362 = vrot.slane %v2361, 2
      %v2363 = vmax.f32 %v2361, %v2362
      %v2364 = vrot.slane %v2363, 1
      %v2365 = vmax.f32 %v2363, %v2364
      %v2366 = vmax.f32 %v1784, %v1785
      %v2367 = vrot.slane %v2366, 4
      %v2368 = vmax.f32 %v2366, %v2367
      %v2369 = vrot.slane %v2368, 2
      %v2370 = vmax.f32 %v2368, %v2369
      %v2371 = vrot.slane %v2370, 1
      %v2372 = vmax.f32 %v2370, %v2371
      %v2373 = vmax.f32 %v1786, %v1787
      %v2374 = vrot.slane %v2373, 4
      %v2375 = vmax.f32 %v2373, %v2374
      %v2376 = vrot.slane %v2375, 2
      %v2377 = vmax.f32 %v2375, %v2376
      %v2378 = vrot.slane %v2377, 1
      %v2379 = vmax.f32 %v2377, %v2378
      %v2380 = vsel %vm2310, %v2330, %v2337
      %v2381 = vsel %vm2312, %v2380, %v2344
      %v2382 = vsel %vm2314, %v2381, %v2351
      %v2383 = vsel %vm2316, %v2382, %v2358
      %v2384 = vsel %vm2318, %v2383, %v2365
      %v2385 = vsel %vm2320, %v2384, %v2372
      %v2386 = vsel %vm2322, %v2385, %v2379
      %v2387 = vld [vmem:[%s2 + $0x120] sm:$0xf]
      %v2388 = vld [vmem:[%s2 + $0x128] sm:$0xf]
      %v2389 = vld [vmem:[%s2 + $0x130] sm:$0xf]
      %v2390 = vld [vmem:[%s2 + $0x138] sm:$0xf]
      %v2391 = vld [vmem:[%s2 + $0x140] sm:$0xf]
      %v2392 = vld [vmem:[%s2 + $0x148] sm:$0xf]
      %v2393 = vld [vmem:[%s2 + $0x150] sm:$0xf]
      %v2394 = vld [vmem:[%s2 + $0x158] sm:$0xf]
      %v2395 = vld [vmem:[%s2 + $0x160] sm:$0xf]
      %v2396 = vld [vmem:[%s2 + $0x168] sm:$0xf]
      %v2397 = vld [vmem:[%s2 + $0x170] sm:$0xf]
      %v2398 = vld [vmem:[%s2 + $0x178] sm:$0xf]
      %v2399 = vld [vmem:[%s2 + $0x180] sm:$0xf]
      %v2400 = vld [vmem:[%s2 + $0x188] sm:$0xf]
      %v2401 = vld [vmem:[%s2 + $0x190] sm:$0xf]
      %v2402 = vld [vmem:[%s2 + $0x198] sm:$0xf]
      %v2403 = vld [vmem:[%s2 + $0x1a0] sm:$0xf]
      %v2404 = vld [vmem:[%s2 + $0x1a8] sm:$0xf]
      %v2405 = vld [vmem:[%s2 + $0x1b0] sm:$0xf]
      %v2406 = vld [vmem:[%s2 + $0x1b8] sm:$0xf]
      %v2407 = vld [vmem:[%s2 + $0x1c0] sm:$0xf]
      %v2408 = vld [vmem:[%s2 + $0x1c8] sm:$0xf]
      %v2409 = vld [vmem:[%s2 + $0x1d0] sm:$0xf]
      %v2410 = vld [vmem:[%s2 + $0x1d8] sm:$0xf]
      %v2411 = vld [vmem:[%s2 + $0x1e0] sm:$0xf]
      %v2412 = vld [vmem:[%s2 + $0x1e8] sm:$0xf]
      %v2413 = vld [vmem:[%s2 + $0x1f0] sm:$0xf]
      %v2414 = vld [vmem:[%s2 + $0x1f8] sm:$0xf]
      %v2415 = vld [vmem:[%s2 + $0x200] sm:$0xf]
      %v2416 = vld [vmem:[%s2 + $0x208] sm:$0xf]
      %v2417 = vld [vmem:[%s2 + $0x210] sm:$0xf]
      %v2418 = vld [vmem:[%s2 + $0x218] sm:$0xf]
      %v2419 = vpack.c.bf16 %v2323, %v2323
      %v2420 = vpack.c.bf16 %v2386, %v2386
      %v2437 = vunpack.c.l.b16 %v2403
      %v2438 = vunpack.c.l.b16 %v2404
      %v2439 = vunpack.c.l.b16 %v2405
      %v2440 = vunpack.c.l.b16 %v2406
      %v2441 = vunpack.c.l.b16 %v2407
      %v2442 = vunpack.c.l.b16 %v2408
      %v2443 = vunpack.c.l.b16 %v2409
      %v2444 = vunpack.c.l.b16 %v2410
      %v2445 = vunpack.c.l.b16 %v2411
      %v2446 = vunpack.c.l.b16 %v2412
      %v2447 = vunpack.c.l.b16 %v2413
      %v2448 = vunpack.c.l.b16 %v2414
      %v2449 = vunpack.c.l.b16 %v2415
      %v2450 = vunpack.c.l.b16 %v2416
      %v2451 = vunpack.c.l.b16 %v2417
      %v2452 = vunpack.c.l.b16 %v2418
      %v2453 = vpack.c.b16 %v2438, %v2437
      %v2454 = vpack.c.b16 %v2440, %v2439
      %v2455 = vpack.c.b16 %v2442, %v2441
      %v2456 = vpack.c.b16 %v2444, %v2443
      %v2457 = vpack.c.b16 %v2446, %v2445
      %v2458 = vpack.c.b16 %v2448, %v2447
      %v2459 = vpack.c.b16 %v2450, %v2449
      %v2460 = vpack.c.b16 %v2452, %v2451
      %2469 = vmatpush.bf16.msra.mxu0 %v2460
      %2470 = vmatpush.bf16.msra.mxu0 %v2459
      %2471 = vmatpush.bf16.msra.mxu0 %v2458
      %2472 = vmatpush.bf16.msra.mxu0 %v2457
      %2473 = vmatpush.bf16.msra.mxu0 %v2456
      %2474 = vmatpush.bf16.msra.mxu0 %v2455
      %2475 = vmatpush.bf16.msra.mxu0 %v2454
      %2476 = vmatpush.bf16.msra.mxu0 %v2453
      %2477 = vmatmul.bf16.gmra.mxu0 %v2420
      %v2478 = vpop.f32.mrf.mxu0
      %v2479 = vadd.f32 0.0, %v2478
      %v2480 = vpop.f32.mrf.mxu0
      %2481 = vdwg.mxu0
      %v2498 = vunpack.c.l.b16 %v2387
      %v2499 = vunpack.c.l.b16 %v2388
      %v2500 = vunpack.c.l.b16 %v2389
      %v2501 = vunpack.c.l.b16 %v2390
      %v2502 = vunpack.c.l.b16 %v2391
      %v2503 = vunpack.c.l.b16 %v2392
      %v2504 = vunpack.c.l.b16 %v2393
      %v2505 = vunpack.c.l.b16 %v2394
      %v2506 = vunpack.c.l.b16 %v2395
      %v2507 = vunpack.c.l.b16 %v2396
      %v2508 = vunpack.c.l.b16 %v2397
      %v2509 = vunpack.c.l.b16 %v2398
      %v2510 = vunpack.c.l.b16 %v2399
      %v2511 = vunpack.c.l.b16 %v2400
      %v2512 = vunpack.c.l.b16 %v2401
      %v2513 = vunpack.c.l.b16 %v2402
      %v2514 = vpack.c.b16 %v2499, %v2498
      %v2515 = vpack.c.b16 %v2501, %v2500
      %v2516 = vpack.c.b16 %v2503, %v2502
      %v2517 = vpack.c.b16 %v2505, %v2504
      %v2518 = vpack.c.b16 %v2507, %v2506
      %v2519 = vpack.c.b16 %v2509, %v2508
      %v2520 = vpack.c.b16 %v2511, %v2510
      %v2521 = vpack.c.b16 %v2513, %v2512
      %2530 = vmatpush.bf16.msra.mxu0 %v2521
      %2531 = vmatpush.bf16.msra.mxu0 %v2520
      %2532 = vmatpush.bf16.msra.mxu0 %v2519
      %2533 = vmatpush.bf16.msra.mxu0 %v2518
      %2534 = vmatpush.bf16.msra.mxu0 %v2517
      %2535 = vmatpush.bf16.msra.mxu0 %v2516
      %2536 = vmatpush.bf16.msra.mxu0 %v2515
      %2537 = vmatpush.bf16.msra.mxu0 %v2514
      %2538 = vmatmul.bf16.gmra.mxu0 %v2419
      %v2539 = vpop.f32.mrf.mxu0
      %v2540 = vadd.f32 %v2479, %v2539
      %v2541 = vpop.f32.mrf.mxu0
      %2542 = vdwg.mxu0
      %v2543 = vperm.slane %v238, 6
      %v2544 = vadd.f32 %v2540, %v2543
      %v2545 = vmax.f32 %v2544, 0.0
      %v2546 = vperm.slane %v238, 7
      %v2547 = vmul.f32 %v2545, %v2546
      %v2548 = vperm.slane %v239, 0
      %v2549 = vadd.f32 %v2547, %v2548
      %v2550 = vperm.slane %v239, 1
      %v2551 = vmul.f32 %v2549, %v2550
      %2552 = vadd.xlane.f32.xlu0 %v2551
      %v2553 = vpop.xlane.xlu0 %2552
      %v2554 = vperm.slane %v239, 2
      %v2555 = vadd.f32 %v2553, %v2554
      %2557 = vset.pattern.permute.xlu0 0
      %2558 = vperm.xlu0 %2557, %v2555
      %v2559 = vpop.permute.xlu0 %2558
      %2561 = vst [vmem:[%s219] sm:$0xff] %v2559
      %p2562 = scmp.lt.s32.totalorder %s15, 1
      %s2563 = scalar_select %p2562, %s15, 1
      %s2564 = smul.addr %s2563, 8
      %s2565 = scalar_lea.vmem %s4, %s2564
      // Predicated region
      $region37: #{gcn_predictor_forward.1} parent=35 // pred_check
        %p2566 = pneg %p127
      $region38: #{gcn_predictor_forward.1} parent=35 // pred_check_branch
        %2568 = sbr.rel (%p2566) target = $region40
      $region39: #{gcn_predictor_forward.1} parent=35 // pred_region
        _
      $region40: #{gcn_predictor_forward.1} parent=35 // pred_fallthru
        _
    $region36: #{gcn_predictor_forward.1} parent=5 // pred_fallthru
      _
    %p2569 = scmp.le.s32.totalorder 2, %s10
    // Predicated region
    $region41: #{gcn_predictor_forward.1} parent=5 // pred_check
      %p2570 = pneg %p2569
    $region42: #{gcn_predictor_forward.1} parent=5 // pred_check_branch
      %2572 = sbr.rel (%p2570) target = $region44
    $region43: #{gcn_predictor_forward.1} parent=5 // pred_region
      %s2573 = ssub.s32 %s10, 2
      // Predicated region
      $region45: #{gcn_predictor_forward.1} parent=43 // pred_check
        %p2574 = pneg %p133
      $region46: #{gcn_predictor_forward.1} parent=43 // pred_check_branch
        %2576 = sbr.rel (%p2574) target = $region48
      $region47: #{gcn_predictor_forward.1} parent=43 // pred_region
        %p2577 = scmp.lt.s32.totalorder %s16, 1
        %s2578 = scalar_select %p2577, %s16, 1
        %s2579 = smul.addr %s2578, 8
        %s2580 = scalar_lea.vmem %s4, %s2579
      $region48: #{gcn_predictor_forward.1} parent=43 // pred_fallthru
        _
    $region44: #{gcn_predictor_forward.1} parent=5 // pred_fallthru
      _
  $region6: #{gcn_predictor_forward.1} parent=0 // loop_footer
    %s14 = sadd.s32 1, %s10
  $region7: #{gcn_predictor_forward.1} parent=0 // loop_footer_branch
    %9 = sbr.rel target = $region3
  $region8: #{gcn_predictor_forward.1} parent=0 // loop_exit
    _

</llo_original>
